<compile_context>
chip_gen: v5e
topology: v5e:2x2
jax: 0.10.0
libtpu: 0.0.40
codegen_flags: <defaults>
</compile_context>

<pallas_src>
import functools

import jax
import jax.numpy as jnp
from jax.experimental import pallas as pl
from jax.experimental.pallas import tpu as pltpu


# ----------------------------------------------------------------------------
# Fused kernel: bi-LSTM + deep unidirectional stack, everything resident in VMEM.
# Gate layout for the fused bi layer (8*h2 wide): [i_f|i_b|f_f|f_b|g_f|g_b|o_f|o_b],
# state layout (2*h2 wide): [h_f|h_b], [c_f|c_b].
# PyTorch gate order per direction: [i, f, g, o]; c' = f*c + i*g; h' = o*tanh(c').
# ----------------------------------------------------------------------------
def _fused_lstm_kernel(gx_bi_ref, whh_bi_ref, wih_d_ref, whh_d_ref, b_d_ref,
                       out_ref, hn_ref, cn_ref, act_scr):
    T, Bp, G = gx_bi_ref.shape            # G = 8 * h2
    h2 = G // 8
    H = 2 * h2                            # hidden_size
    L = wih_d_ref.shape[0]                # num_layers - 1
    f32 = jnp.float32

    # ----------------- Stage 1: fused bidirectional layer -----------------
    whh_bi = whh_bi_ref[...]              # (2*h2, 8*h2) block-diagonal, interleaved gates

    # Hoisted lane mask: g-gate lanes of the interleaved layout are [4*h2, 6*h2).
    lane_bi = jax.lax.broadcasted_iota(jnp.int32, (Bp, G), 1)
    is_g_bi = jnp.logical_and(lane_bi >= 4 * h2, lane_bi < 6 * h2)

    h = jnp.zeros((Bp, 2 * h2), f32)
    c = jnp.zeros((Bp, 2 * h2), f32)
    for t in range(T):                    # static unroll: full scheduler visibility
        gates = gx_bi_ref[t] + jnp.dot(h, whh_bi, preferred_element_type=f32)  # (Bp, 8*h2)
        # One full-vreg sigmoid + one full-vreg tanh, select g lanes, slice afterwards.
        act = jnp.where(is_g_bi, jnp.tanh(gates), jax.nn.sigmoid(gates))
        i = act[:, 0 * h2:2 * h2]         # [i_f | i_b]
        f = act[:, 2 * h2:4 * h2]         # [f_f | f_b]
        g = act[:, 4 * h2:6 * h2]         # [g_f | g_b]
        o = act[:, 6 * h2:8 * h2]         # [o_f | o_b]
        c = f * c + i * g
        h = o * jnp.tanh(c)
        # Single combined activation scratch: forward half at time t,
        # backward half at original time T-1-t (no concat / relayout afterwards).
        act_scr[t, :, :h2] = h[:, :h2]
        act_scr[T - 1 - t, :, h2:] = h[:, h2:]

    # -------------- Stage 2: deep unidirectional stack (in VMEM) --------------
    lane_d = jax.lax.broadcasted_iota(jnp.int32, (Bp, 4 * H), 1)
    is_g_d = jnp.logical_and(lane_d >= 2 * H, lane_d < 3 * H)

    layer_in = act_scr[...]               # (T, Bp, H) — bi-layer output
    for l in range(L):                    # static unroll over layers
        wih = wih_d_ref[l]                # (H, 4H)
        whh = whh_d_ref[l]                # (H, 4H)
        b = b_d_ref[l]                    # (1, 4H)

        # Hoisted input projection for the whole sequence: one MXU matmul.
        # Kept as a value (vregs) — no scratch store/reload round-trip.
        gx = jnp.dot(layer_in.reshape(T * Bp, H), wih,
                     preferred_element_type=f32) + b                     # (T*Bp, 4H)

        h = jnp.zeros((Bp, H), f32)
        c = jnp.zeros((Bp, H), f32)
        for t in range(T):                # static slice of the resident gx value
            gates = gx[t * Bp:(t + 1) * Bp] + jnp.dot(h, whh, preferred_element_type=f32)
            act = jnp.where(is_g_d, jnp.tanh(gates), jax.nn.sigmoid(gates))
            i = act[:, 0 * H:1 * H]
            f = act[:, 1 * H:2 * H]
            g = act[:, 2 * H:3 * H]
            o = act[:, 3 * H:4 * H]
            c = f * c + i * g
            h = o * jnp.tanh(c)
            out_ref[t] = h                # out_ref doubles as inter-layer staging buffer
        hn_ref[l] = h
        cn_ref[l] = c
        if l + 1 < L:
            layer_in = out_ref[...]       # read staged activations for the next layer


# ----------------------------------------------------------------------------
# One-time weight packing (hoisted out of the per-call path).
# ----------------------------------------------------------------------------
def pack_params(params, input_size, hidden_size, num_layers):
    f32 = jnp.float32
    D = input_size
    h2 = hidden_size // 2
    H = hidden_size
    L = num_layers - 1
    pf, pb = params["bi_fwd"], params["bi_bwd"]

    # Combined bi input weight over [x | x_time_reversed]: (2D, 8*h2) with the
    # interleaved gate layout [i_f i_b f_f f_b g_f g_b o_f o_b].
    wf = pf["w_ih"].astype(f32).T                      # (D, 4*h2), cols = [i|f|g|o]
    wb = pb["w_ih"].astype(f32).T
    w_bi_in = jnp.zeros((2 * D, 8 * h2), f32)
    for k in range(4):
        w_bi_in = w_bi_in.at[:D, (2 * k) * h2:(2 * k + 1) * h2].set(wf[:, k * h2:(k + 1) * h2])
        w_bi_in = w_bi_in.at[D:, (2 * k + 1) * h2:(2 * k + 2) * h2].set(wb[:, k * h2:(k + 1) * h2])

    # Interleaved combined bias.
    bf = (pf["b_ih"] + pf["b_hh"]).astype(f32).reshape(4, h2)
    bb = (pb["b_ih"] + pb["b_hh"]).astype(f32).reshape(4, h2)
    b_bi = jnp.stack([bf, bb], axis=1).reshape(1, 8 * h2)

    # Block-diagonal recurrent weight in the interleaved gate layout.
    whf = pf["w_hh"].astype(f32).T                     # (h2, 4*h2)
    whb = pb["w_hh"].astype(f32).T
    whh_bi = jnp.zeros((2 * h2, 8 * h2), f32)
    for k in range(4):
        whh_bi = whh_bi.at[:h2, (2 * k) * h2:(2 * k + 1) * h2].set(whf[:, k * h2:(k + 1) * h2])
        whh_bi = whh_bi.at[h2:, (2 * k + 1) * h2:(2 * k + 2) * h2].set(whb[:, k * h2:(k + 1) * h2])

    # Stacked deep-layer weights.
    wih_d = jnp.stack([params[f"deep_{l}"]["w_ih"].astype(f32).T for l in range(L)])  # (L,H,4H)
    whh_d = jnp.stack([params[f"deep_{l}"]["w_hh"].astype(f32).T for l in range(L)])  # (L,H,4H)
    b_d = jnp.stack([(params[f"deep_{l}"]["b_ih"] + params[f"deep_{l}"]["b_hh"])
                     .astype(f32).reshape(1, 4 * H) for l in range(L)])               # (L,1,4H)

    return dict(w_bi_in=w_bi_in, b_bi=b_bi, whh_bi=whh_bi,
                wih_d=wih_d, whh_d=whh_d, b_d=b_d)


# ----------------------------------------------------------------------------
# Wrapper: ONE einsum for the hoisted bi input projection, pad batch, pallas_call.
# ----------------------------------------------------------------------------
def forward_pallas(x_btd, packed, num_layers):
    """x_btd: (B, T, input_size) batch_first. Returns (output (B,T,H), (h_n, c_n))."""
    f32 = jnp.float32
    x = x_btd.astype(f32)
    B, T, D = x.shape
    h2 = packed["w_bi_in"].shape[1] // 8
    H = 2 * h2
    L = num_layers - 1
    Bp = max(8, ((B + 7) // 8) * 8)       # pad batch to a sublane multiple

    # Pad the (small) input, not the gates; fold the backward time reversal into the
    # contracting dimension so a single einsum produces the fused bi gates directly.
    xp = jnp.pad(x, ((0, Bp - B), (0, 0), (0, 0)))               # (Bp, T, D)
    x2 = jnp.concatenate([xp, xp[:, ::-1, :]], axis=-1)          # (Bp, T, 2D)
    gx_bi = jnp.einsum("btd,dg->tbg", x2, packed["w_bi_in"]) + packed["b_bi"]  # (T,Bp,8h2)

    out, hn, cn = pl.pallas_call(
        _fused_lstm_kernel,
        out_shape=(
            jax.ShapeDtypeStruct((T, Bp, H), f32),
            jax.ShapeDtypeStruct((L, Bp, H), f32),
            jax.ShapeDtypeStruct((L, Bp, H), f32),
        ),
        in_specs=[pl.BlockSpec(memory_space=pltpu.MemorySpace.VMEM) for _ in range(5)],
        out_specs=(
            pl.BlockSpec(memory_space=pltpu.MemorySpace.VMEM),
            pl.BlockSpec(memory_space=pltpu.MemorySpace.VMEM),
            pl.BlockSpec(memory_space=pltpu.MemorySpace.VMEM),
        ),
        scratch_shapes=[
            pltpu.VMEM((T, Bp, H), f32),  # combined bi activations [h_f | h_b]
        ],
    )(gx_bi, packed["whh_bi"], packed["wih_d"], packed["whh_d"], packed["b_d"])

    output = jnp.transpose(out[:, :B, :], (1, 0, 2))             # (B, T, H) batch_first
    return output, (hn[:, :B, :], cn[:, :B, :])


# ----------------------------------------------------------------------------
# Pure-JAX reference (lax.scan per layer) for correctness checking.
# ----------------------------------------------------------------------------
def lstm_layer_ref(x_tbd, w_ih, w_hh, b_ih, b_hh, *, reverse=False):
    T, B, D = x_tbd.shape
    Hh = w_hh.shape[1]
    xs = x_tbd[::-1] if reverse else x_tbd

    def step(carry, x_t):
        h, c = carry
        gates = x_t @ w_ih.T + h @ w_hh.T + b_ih + b_hh
        i, f, g, o = jnp.split(gates, 4, axis=-1)
        i = jax.nn.sigmoid(i); f = jax.nn.sigmoid(f)
        g = jnp.tanh(g); o = jax.nn.sigmoid(o)
        c = f * c + i * g
        h = o * jnp.tanh(c)
        return (h, c), h

    init = (jnp.zeros((B, Hh), jnp.float32), jnp.zeros((B, Hh), jnp.float32))
    (h, c), ys = jax.lax.scan(step, init, xs)
    if reverse:
        ys = ys[::-1]
    return ys, h, c


def forward_ref(x_btd, params, num_layers):
    x_tbd = jnp.transpose(x_btd, (1, 0, 2)).astype(jnp.float32)
    pf, pb = params["bi_fwd"], params["bi_bwd"]
    out_f, _, _ = lstm_layer_ref(x_tbd, pf["w_ih"], pf["w_hh"], pf["b_ih"], pf["b_hh"])
    out_b, _, _ = lstm_layer_ref(x_tbd, pb["w_ih"], pb["w_hh"], pb["b_ih"], pb["b_hh"],
                                 reverse=True)
    layer_in = jnp.concatenate([out_f, out_b], axis=-1)
    h_n, c_n = [], []
    for l in range(num_layers - 1):
        p = params[f"deep_{l}"]
        layer_in, h_l, c_l = lstm_layer_ref(layer_in, p["w_ih"], p["w_hh"],
                                            p["b_ih"], p["b_hh"])
        h_n.append(h_l); c_n.append(c_l)
    return jnp.transpose(layer_in, (1, 0, 2)), (jnp.stack(h_n, 0), jnp.stack(c_n, 0))


# ----------------------------------------------------------------------------
# Parameter construction (deterministic, PyTorch-style U(-1/sqrt(H), 1/sqrt(H))).
# ----------------------------------------------------------------------------
def _uniform(key, shape, bound):
    return jax.random.uniform(key, shape, jnp.float32, -bound, bound)


def init_params(key, input_size, hidden_size, num_layers):
    params = {}
    h2 = hidden_size // 2
    keys = iter(jax.random.split(key, 64))

    for tag in ("fwd", "bwd"):
        b = 1.0 / jnp.sqrt(h2)
        params[f"bi_{tag}"] = dict(
            w_ih=_uniform(next(keys), (4 * h2, input_size), b),
            w_hh=_uniform(next(keys), (4 * h2, h2), b),
            b_ih=_uniform(next(keys), (4 * h2,), b),
            b_hh=_uniform(next(keys), (4 * h2,), b),
        )

    H = hidden_size
    bH = 1.0 / jnp.sqrt(H)
    for l in range(num_layers - 1):
        params[f"deep_{l}"] = dict(
            w_ih=_uniform(next(keys), (4 * H, H), bH),
            w_hh=_uniform(next(keys), (4 * H, H), bH),
            b_ih=_uniform(next(keys), (4 * H,), bH),
            b_hh=_uniform(next(keys), (4 * H,), bH),
        )
    return params


if __name__ == "__main__":
    batch, seq_len = 2, 8
    input_size, hidden_size, num_layers = 16, 32, 3

    key = jax.random.PRNGKey(0)
    k_params, k_x = jax.random.split(key)
    params = init_params(k_params, input_size, hidden_size, num_layers)
    x = jax.random.normal(k_x, (batch, seq_len, input_size), jnp.float32)

    # Weight packing happens ONCE, outside the per-call path.
    packed = pack_params(params, input_size, hidden_size, num_layers)
    packed = jax.tree_util.tree_map(jnp.asarray, packed)

    run_pallas = jax.jit(functools.partial(forward_pallas, num_layers=num_layers))
    run_ref = jax.jit(functools.partial(forward_ref, num_layers=num_layers))

    out_p, (hn_p, cn_p) = run_pallas(x, packed)
    jax.block_until_ready((out_p, hn_p, cn_p))

    out_r, (hn_r, cn_r) = run_ref(x, params)
    jax.block_until_ready((out_r, hn_r, cn_r))

    assert out_p.shape == (batch, seq_len, hidden_size)
    assert hn_p.shape == (num_layers - 1, batch, hidden_size)
    assert cn_p.shape == (num_layers - 1, batch, hidden_size)
    assert jnp.allclose(out_p, out_r, atol=1e-4, rtol=1e-4), \
        float(jnp.max(jnp.abs(out_p - out_r)))
    assert jnp.allclose(hn_p, hn_r, atol=1e-4, rtol=1e-4)
    assert jnp.allclose(cn_p, cn_r, atol=1e-4, rtol=1e-4)

    print("KERNEL_OK")
</pallas_src>

<mosaic_0001>
module attributes {stable_mosaic.version = 11 : i64} {
  func.func @_fused_lstm_kernel(%arg0: memref<8x8x128xf32, #tpu.memory_space<vmem>>, %arg1: memref<32x128xf32, #tpu.memory_space<vmem>>, %arg2: memref<2x32x128xf32, #tpu.memory_space<vmem>>, %arg3: memref<2x32x128xf32, #tpu.memory_space<vmem>>, %arg4: memref<2x1x128xf32, #tpu.memory_space<vmem>>, %arg5: memref<8x8x32xf32, #tpu.memory_space<vmem>>, %arg6: memref<2x8x32xf32, #tpu.memory_space<vmem>>, %arg7: memref<2x8x32xf32, #tpu.memory_space<vmem>>, %arg8: memref<8x8x32xf32, #tpu.memory_space<vmem>>) attributes {dimension_semantics = [], scalar_prefetch = 0 : i64, scratch_operands = 1 : i64, tpu.core_type = #tpu.core_type<tc>} {
    %c0 = arith.constant 0 : index
    %c0_0 = arith.constant 0 : index
    %0 = vector.load %arg1[%c0, %c0_0] : memref<32x128xf32, #tpu.memory_space<vmem>>, vector<32x128xf32>
    %1 = tpu.iota {dimensions = array<i32: 1>} : vector<8x128xi32>
    %c64_i32 = arith.constant 64 : i32
    %2 = vector.broadcast %c64_i32 : i32 to vector<8x128xi32>
    %3 = arith.cmpi sge, %1, %2 : vector<8x128xi32>
    %c96_i32 = arith.constant 96 : i32
    %4 = vector.broadcast %c96_i32 : i32 to vector<8x128xi32>
    %5 = arith.cmpi slt, %1, %4 : vector<8x128xi32>
    %6 = arith.andi %3, %5 : vector<8x128xi1>
    %cst = arith.constant 0.000000e+00 : f32
    %7 = vector.broadcast %cst : f32 to vector<8x32xf32>
    %cst_1 = arith.constant 0.000000e+00 : f32
    %8 = vector.broadcast %cst_1 : f32 to vector<8x32xf32>
    %c0_2 = arith.constant 0 : index
    %c0_3 = arith.constant 0 : index
    %c0_4 = arith.constant 0 : index
    %9 = vector.load %arg0[%c0_2, %c0_3, %c0_4] : memref<8x8x128xf32, #tpu.memory_space<vmem>>, vector<1x8x128xf32>
    %10 = vector.shape_cast %9 : vector<1x8x128xf32> to vector<8x128xf32>
    %cst_5 = arith.constant dense<0.000000e+00> : vector<8x128xf32>
    %11 = tpu.matmul %7, %0, %cst_5 {dimension_numbers = #tpu.dot_dimension_numbers<[1], [0], [0], [1], [0, 0, 1, 1], [], []>} : vector<8x32xf32>, vector<32x128xf32>, vector<8x128xf32> -> vector<8x128xf32>
    %12 = arith.addf %10, %11 : vector<8x128xf32>
    %13 = math.tanh %12 : vector<8x128xf32>
    %14 = arith.negf %12 : vector<8x128xf32>
    %15 = math.exp %14 : vector<8x128xf32>
    %cst_6 = arith.constant 1.000000e+00 : f32
    %16 = vector.broadcast %cst_6 : f32 to vector<8x128xf32>
    %17 = arith.addf %16, %15 : vector<8x128xf32>
    %18 = arith.divf %16, %17 : vector<8x128xf32>
    %19 = arith.select %6, %13, %18 : vector<8x128xi1>, vector<8x128xf32>
    %20 = vector.extract_strided_slice %19 {offsets = [0, 0], sizes = [8, 32], strides = [1, 1]} : vector<8x128xf32> to vector<8x32xf32>
    %21 = vector.extract_strided_slice %19 {offsets = [0, 32], sizes = [8, 32], strides = [1, 1]} : vector<8x128xf32> to vector<8x32xf32>
    %22 = vector.extract_strided_slice %19 {offsets = [0, 64], sizes = [8, 32], strides = [1, 1]} : vector<8x128xf32> to vector<8x32xf32>
    %23 = vector.extract_strided_slice %19 {offsets = [0, 96], sizes = [8, 32], strides = [1, 1]} : vector<8x128xf32> to vector<8x32xf32>
    %24 = arith.mulf %21, %8 : vector<8x32xf32>
    %25 = arith.mulf %20, %22 : vector<8x32xf32>
    %26 = arith.addf %24, %25 : vector<8x32xf32>
    %27 = math.tanh %26 : vector<8x32xf32>
    %28 = arith.mulf %23, %27 : vector<8x32xf32>
    %29 = vector.extract_strided_slice %28 {offsets = [0, 0], sizes = [8, 16], strides = [1, 1]} : vector<8x32xf32> to vector<8x16xf32>
    %c0_7 = arith.constant 0 : index
    %c0_8 = arith.constant 0 : index
    %c0_9 = arith.constant 0 : index
    %30 = vector.load %arg8[%c0_7, %c0_8, %c0_9] : memref<8x8x32xf32, #tpu.memory_space<vmem>>, vector<1x8x16xf32>
    %31 = vector.shape_cast %30 : vector<1x8x16xf32> to vector<8x16xf32>
    %32 = vector.shape_cast %29 : vector<8x16xf32> to vector<1x8x16xf32>
    tpu.vector_store %arg8[%c0_7, %c0_8, %c0_9], %32 {strides = array<i32>} : memref<8x8x32xf32, #tpu.memory_space<vmem>>, vector<1x8x16xf32>,
    %33 = vector.extract_strided_slice %28 {offsets = [0, 16], sizes = [8, 16], strides = [1, 1]} : vector<8x32xf32> to vector<8x16xf32>
    %c7 = arith.constant 7 : index
    %c0_10 = arith.constant 0 : index
    %c16 = arith.constant 16 : index
    %34 = vector.load %arg8[%c7, %c0_10, %c16] : memref<8x8x32xf32, #tpu.memory_space<vmem>>, vector<1x8x16xf32>
    %35 = vector.shape_cast %34 : vector<1x8x16xf32> to vector<8x16xf32>
    %36 = vector.shape_cast %33 : vector<8x16xf32> to vector<1x8x16xf32>
    tpu.vector_store %arg8[%c7, %c0_10, %c16], %36 {strides = array<i32>} : memref<8x8x32xf32, #tpu.memory_space<vmem>>, vector<1x8x16xf32>,
    %c1 = arith.constant 1 : index
    %c0_11 = arith.constant 0 : index
    %c0_12 = arith.constant 0 : index
    %37 = vector.load %arg0[%c1, %c0_11, %c0_12] : memref<8x8x128xf32, #tpu.memory_space<vmem>>, vector<1x8x128xf32>
    %38 = vector.shape_cast %37 : vector<1x8x128xf32> to vector<8x128xf32>
    %cst_13 = arith.constant dense<0.000000e+00> : vector<8x128xf32>
    %39 = tpu.matmul %28, %0, %cst_13 {dimension_numbers = #tpu.dot_dimension_numbers<[1], [0], [0], [1], [0, 0, 1, 1], [], []>} : vector<8x32xf32>, vector<32x128xf32>, vector<8x128xf32> -> vector<8x128xf32>
    %40 = arith.addf %38, %39 : vector<8x128xf32>
    %41 = math.tanh %40 : vector<8x128xf32>
    %42 = arith.negf %40 : vector<8x128xf32>
    %43 = math.exp %42 : vector<8x128xf32>
    %cst_14 = arith.constant 1.000000e+00 : f32
    %44 = vector.broadcast %cst_14 : f32 to vector<8x128xf32>
    %45 = arith.addf %44, %43 : vector<8x128xf32>
    %46 = arith.divf %44, %45 : vector<8x128xf32>
    %47 = arith.select %6, %41, %46 : vector<8x128xi1>, vector<8x128xf32>
    %48 = vector.extract_strided_slice %47 {offsets = [0, 0], sizes = [8, 32], strides = [1, 1]} : vector<8x128xf32> to vector<8x32xf32>
    %49 = vector.extract_strided_slice %47 {offsets = [0, 32], sizes = [8, 32], strides = [1, 1]} : vector<8x128xf32> to vector<8x32xf32>
    %50 = vector.extract_strided_slice %47 {offsets = [0, 64], sizes = [8, 32], strides = [1, 1]} : vector<8x128xf32> to vector<8x32xf32>
    %51 = vector.extract_strided_slice %47 {offsets = [0, 96], sizes = [8, 32], strides = [1, 1]} : vector<8x128xf32> to vector<8x32xf32>
    %52 = arith.mulf %49, %26 : vector<8x32xf32>
    %53 = arith.mulf %48, %50 : vector<8x32xf32>
    %54 = arith.addf %52, %53 : vector<8x32xf32>
    %55 = math.tanh %54 : vector<8x32xf32>
    %56 = arith.mulf %51, %55 : vector<8x32xf32>
    %57 = vector.extract_strided_slice %56 {offsets = [0, 0], sizes = [8, 16], strides = [1, 1]} : vector<8x32xf32> to vector<8x16xf32>
    %c1_15 = arith.constant 1 : index
    %c0_16 = arith.constant 0 : index
    %c0_17 = arith.constant 0 : index
    %58 = vector.load %arg8[%c1_15, %c0_16, %c0_17] : memref<8x8x32xf32, #tpu.memory_space<vmem>>, vector<1x8x16xf32>
    %59 = vector.shape_cast %58 : vector<1x8x16xf32> to vector<8x16xf32>
    %60 = vector.shape_cast %57 : vector<8x16xf32> to vector<1x8x16xf32>
    tpu.vector_store %arg8[%c1_15, %c0_16, %c0_17], %60 {strides = array<i32>} : memref<8x8x32xf32, #tpu.memory_space<vmem>>, vector<1x8x16xf32>,
    %61 = vector.extract_strided_slice %56 {offsets = [0, 16], sizes = [8, 16], strides = [1, 1]} : vector<8x32xf32> to vector<8x16xf32>
    %c6 = arith.constant 6 : index
    %c0_18 = arith.constant 0 : index
    %c16_19 = arith.constant 16 : index
    %62 = vector.load %arg8[%c6, %c0_18, %c16_19] : memref<8x8x32xf32, #tpu.memory_space<vmem>>, vector<1x8x16xf32>
    %63 = vector.shape_cast %62 : vector<1x8x16xf32> to vector<8x16xf32>
    %64 = vector.shape_cast %61 : vector<8x16xf32> to vector<1x8x16xf32>
    tpu.vector_store %arg8[%c6, %c0_18, %c16_19], %64 {strides = array<i32>} : memref<8x8x32xf32, #tpu.memory_space<vmem>>, vector<1x8x16xf32>,
    %c2 = arith.constant 2 : index
    %c0_20 = arith.constant 0 : index
    %c0_21 = arith.constant 0 : index
    %65 = vector.load %arg0[%c2, %c0_20, %c0_21] : memref<8x8x128xf32, #tpu.memory_space<vmem>>, vector<1x8x128xf32>
    %66 = vector.shape_cast %65 : vector<1x8x128xf32> to vector<8x128xf32>
    %cst_22 = arith.constant dense<0.000000e+00> : vector<8x128xf32>
    %67 = tpu.matmul %56, %0, %cst_22 {dimension_numbers = #tpu.dot_dimension_numbers<[1], [0], [0], [1], [0, 0, 1, 1], [], []>} : vector<8x32xf32>, vector<32x128xf32>, vector<8x128xf32> -> vector<8x128xf32>
    %68 = arith.addf %66, %67 : vector<8x128xf32>
    %69 = math.tanh %68 : vector<8x128xf32>
    %70 = arith.negf %68 : vector<8x128xf32>
    %71 = math.exp %70 : vector<8x128xf32>
    %cst_23 = arith.constant 1.000000e+00 : f32
    %72 = vector.broadcast %cst_23 : f32 to vector<8x128xf32>
    %73 = arith.addf %72, %71 : vector<8x128xf32>
    %74 = arith.divf %72, %73 : vector<8x128xf32>
    %75 = arith.select %6, %69, %74 : vector<8x128xi1>, vector<8x128xf32>
    %76 = vector.extract_strided_slice %75 {offsets = [0, 0], sizes = [8, 32], strides = [1, 1]} : vector<8x128xf32> to vector<8x32xf32>
    %77 = vector.extract_strided_slice %75 {offsets = [0, 32], sizes = [8, 32], strides = [1, 1]} : vector<8x128xf32> to vector<8x32xf32>
    %78 = vector.extract_strided_slice %75 {offsets = [0, 64], sizes = [8, 32], strides = [1, 1]} : vector<8x128xf32> to vector<8x32xf32>
    %79 = vector.extract_strided_slice %75 {offsets = [0, 96], sizes = [8, 32], strides = [1, 1]} : vector<8x128xf32> to vector<8x32xf32>
    %80 = arith.mulf %77, %54 : vector<8x32xf32>
    %81 = arith.mulf %76, %78 : vector<8x32xf32>
    %82 = arith.addf %80, %81 : vector<8x32xf32>
    %83 = math.tanh %82 : vector<8x32xf32>
    %84 = arith.mulf %79, %83 : vector<8x32xf32>
    %85 = vector.extract_strided_slice %84 {offsets = [0, 0], sizes = [8, 16], strides = [1, 1]} : vector<8x32xf32> to vector<8x16xf32>
    %c2_24 = arith.constant 2 : index
    %c0_25 = arith.constant 0 : index
    %c0_26 = arith.constant 0 : index
    %86 = vector.load %arg8[%c2_24, %c0_25, %c0_26] : memref<8x8x32xf32, #tpu.memory_space<vmem>>, vector<1x8x16xf32>
    %87 = vector.shape_cast %86 : vector<1x8x16xf32> to vector<8x16xf32>
    %88 = vector.shape_cast %85 : vector<8x16xf32> to vector<1x8x16xf32>
    tpu.vector_store %arg8[%c2_24, %c0_25, %c0_26], %88 {strides = array<i32>} : memref<8x8x32xf32, #tpu.memory_space<vmem>>, vector<1x8x16xf32>,
    %89 = vector.extract_strided_slice %84 {offsets = [0, 16], sizes = [8, 16], strides = [1, 1]} : vector<8x32xf32> to vector<8x16xf32>
    %c5 = arith.constant 5 : index
    %c0_27 = arith.constant 0 : index
    %c16_28 = arith.constant 16 : index
    %90 = vector.load %arg8[%c5, %c0_27, %c16_28] : memref<8x8x32xf32, #tpu.memory_space<vmem>>, vector<1x8x16xf32>
    %91 = vector.shape_cast %90 : vector<1x8x16xf32> to vector<8x16xf32>
    %92 = vector.shape_cast %89 : vector<8x16xf32> to vector<1x8x16xf32>
    tpu.vector_store %arg8[%c5, %c0_27, %c16_28], %92 {strides = array<i32>} : memref<8x8x32xf32, #tpu.memory_space<vmem>>, vector<1x8x16xf32>,
    %c3 = arith.constant 3 : index
    %c0_29 = arith.constant 0 : index
    %c0_30 = arith.constant 0 : index
    %93 = vector.load %arg0[%c3, %c0_29, %c0_30] : memref<8x8x128xf32, #tpu.memory_space<vmem>>, vector<1x8x128xf32>
    %94 = vector.shape_cast %93 : vector<1x8x128xf32> to vector<8x128xf32>
    %cst_31 = arith.constant dense<0.000000e+00> : vector<8x128xf32>
    %95 = tpu.matmul %84, %0, %cst_31 {dimension_numbers = #tpu.dot_dimension_numbers<[1], [0], [0], [1], [0, 0, 1, 1], [], []>} : vector<8x32xf32>, vector<32x128xf32>, vector<8x128xf32> -> vector<8x128xf32>
    %96 = arith.addf %94, %95 : vector<8x128xf32>
    %97 = math.tanh %96 : vector<8x128xf32>
    %98 = arith.negf %96 : vector<8x128xf32>
    %99 = math.exp %98 : vector<8x128xf32>
    %cst_32 = arith.constant 1.000000e+00 : f32
    %100 = vector.broadcast %cst_32 : f32 to vector<8x128xf32>
    %101 = arith.addf %100, %99 : vector<8x128xf32>
    %102 = arith.divf %100, %101 : vector<8x128xf32>
    %103 = arith.select %6, %97, %102 : vector<8x128xi1>, vector<8x128xf32>
    %104 = vector.extract_strided_slice %103 {offsets = [0, 0], sizes = [8, 32], strides = [1, 1]} : vector<8x128xf32> to vector<8x32xf32>
    %105 = vector.extract_strided_slice %103 {offsets = [0, 32], sizes = [8, 32], strides = [1, 1]} : vector<8x128xf32> to vector<8x32xf32>
    %106 = vector.extract_strided_slice %103 {offsets = [0, 64], sizes = [8, 32], strides = [1, 1]} : vector<8x128xf32> to vector<8x32xf32>
    %107 = vector.extract_strided_slice %103 {offsets = [0, 96], sizes = [8, 32], strides = [1, 1]} : vector<8x128xf32> to vector<8x32xf32>
    %108 = arith.mulf %105, %82 : vector<8x32xf32>
    %109 = arith.mulf %104, %106 : vector<8x32xf32>
    %110 = arith.addf %108, %109 : vector<8x32xf32>
    %111 = math.tanh %110 : vector<8x32xf32>
    %112 = arith.mulf %107, %111 : vector<8x32xf32>
    %113 = vector.extract_strided_slice %112 {offsets = [0, 0], sizes = [8, 16], strides = [1, 1]} : vector<8x32xf32> to vector<8x16xf32>
    %c3_33 = arith.constant 3 : index
    %c0_34 = arith.constant 0 : index
    %c0_35 = arith.constant 0 : index
    %114 = vector.load %arg8[%c3_33, %c0_34, %c0_35] : memref<8x8x32xf32, #tpu.memory_space<vmem>>, vector<1x8x16xf32>
    %115 = vector.shape_cast %114 : vector<1x8x16xf32> to vector<8x16xf32>
    %116 = vector.shape_cast %113 : vector<8x16xf32> to vector<1x8x16xf32>
    tpu.vector_store %arg8[%c3_33, %c0_34, %c0_35], %116 {strides = array<i32>} : memref<8x8x32xf32, #tpu.memory_space<vmem>>, vector<1x8x16xf32>,
    %117 = vector.extract_strided_slice %112 {offsets = [0, 16], sizes = [8, 16], strides = [1, 1]} : vector<8x32xf32> to vector<8x16xf32>
    %c4 = arith.constant 4 : index
    %c0_36 = arith.constant 0 : index
    %c16_37 = arith.constant 16 : index
    %118 = vector.load %arg8[%c4, %c0_36, %c16_37] : memref<8x8x32xf32, #tpu.memory_space<vmem>>, vector<1x8x16xf32>
    %119 = vector.shape_cast %118 : vector<1x8x16xf32> to vector<8x16xf32>
    %120 = vector.shape_cast %117 : vector<8x16xf32> to vector<1x8x16xf32>
    tpu.vector_store %arg8[%c4, %c0_36, %c16_37], %120 {strides = array<i32>} : memref<8x8x32xf32, #tpu.memory_space<vmem>>, vector<1x8x16xf32>,
    %c4_38 = arith.constant 4 : index
    %c0_39 = arith.constant 0 : index
    %c0_40 = arith.constant 0 : index
    %121 = vector.load %arg0[%c4_38, %c0_39, %c0_40] : memref<8x8x128xf32, #tpu.memory_space<vmem>>, vector<1x8x128xf32>
    %122 = vector.shape_cast %121 : vector<1x8x128xf32> to vector<8x128xf32>
    %cst_41 = arith.constant dense<0.000000e+00> : vector<8x128xf32>
    %123 = tpu.matmul %112, %0, %cst_41 {dimension_numbers = #tpu.dot_dimension_numbers<[1], [0], [0], [1], [0, 0, 1, 1], [], []>} : vector<8x32xf32>, vector<32x128xf32>, vector<8x128xf32> -> vector<8x128xf32>
    %124 = arith.addf %122, %123 : vector<8x128xf32>
    %125 = math.tanh %124 : vector<8x128xf32>
    %126 = arith.negf %124 : vector<8x128xf32>
    %127 = math.exp %126 : vector<8x128xf32>
    %cst_42 = arith.constant 1.000000e+00 : f32
    %128 = vector.broadcast %cst_42 : f32 to vector<8x128xf32>
    %129 = arith.addf %128, %127 : vector<8x128xf32>
    %130 = arith.divf %128, %129 : vector<8x128xf32>
    %131 = arith.select %6, %125, %130 : vector<8x128xi1>, vector<8x128xf32>
    %132 = vector.extract_strided_slice %131 {offsets = [0, 0], sizes = [8, 32], strides = [1, 1]} : vector<8x128xf32> to vector<8x32xf32>
    %133 = vector.extract_strided_slice %131 {offsets = [0, 32], sizes = [8, 32], strides = [1, 1]} : vector<8x128xf32> to vector<8x32xf32>
    %134 = vector.extract_strided_slice %131 {offsets = [0, 64], sizes = [8, 32], strides = [1, 1]} : vector<8x128xf32> to vector<8x32xf32>
    %135 = vector.extract_strided_slice %131 {offsets = [0, 96], sizes = [8, 32], strides = [1, 1]} : vector<8x128xf32> to vector<8x32xf32>
    %136 = arith.mulf %133, %110 : vector<8x32xf32>
    %137 = arith.mulf %132, %134 : vector<8x32xf32>
    %138 = arith.addf %136, %137 : vector<8x32xf32>
    %139 = math.tanh %138 : vector<8x32xf32>
    %140 = arith.mulf %135, %139 : vector<8x32xf32>
    %141 = vector.extract_strided_slice %140 {offsets = [0, 0], sizes = [8, 16], strides = [1, 1]} : vector<8x32xf32> to vector<8x16xf32>
    %c4_43 = arith.constant 4 : index
    %c0_44 = arith.constant 0 : index
    %c0_45 = arith.constant 0 : index
    %142 = vector.load %arg8[%c4_43, %c0_44, %c0_45] : memref<8x8x32xf32, #tpu.memory_space<vmem>>, vector<1x8x16xf32>
    %143 = vector.shape_cast %142 : vector<1x8x16xf32> to vector<8x16xf32>
    %144 = vector.shape_cast %141 : vector<8x16xf32> to vector<1x8x16xf32>
    tpu.vector_store %arg8[%c4_43, %c0_44, %c0_45], %144 {strides = array<i32>} : memref<8x8x32xf32, #tpu.memory_space<vmem>>, vector<1x8x16xf32>,
    %145 = vector.extract_strided_slice %140 {offsets = [0, 16], sizes = [8, 16], strides = [1, 1]} : vector<8x32xf32> to vector<8x16xf32>
    %c3_46 = arith.constant 3 : index
    %c0_47 = arith.constant 0 : index
    %c16_48 = arith.constant 16 : index
    %146 = vector.load %arg8[%c3_46, %c0_47, %c16_48] : memref<8x8x32xf32, #tpu.memory_space<vmem>>, vector<1x8x16xf32>
    %147 = vector.shape_cast %146 : vector<1x8x16xf32> to vector<8x16xf32>
    %148 = vector.shape_cast %145 : vector<8x16xf32> to vector<1x8x16xf32>
    tpu.vector_store %arg8[%c3_46, %c0_47, %c16_48], %148 {strides = array<i32>} : memref<8x8x32xf32, #tpu.memory_space<vmem>>, vector<1x8x16xf32>,
    %c5_49 = arith.constant 5 : index
    %c0_50 = arith.constant 0 : index
    %c0_51 = arith.constant 0 : index
    %149 = vector.load %arg0[%c5_49, %c0_50, %c0_51] : memref<8x8x128xf32, #tpu.memory_space<vmem>>, vector<1x8x128xf32>
    %150 = vector.shape_cast %149 : vector<1x8x128xf32> to vector<8x128xf32>
    %cst_52 = arith.constant dense<0.000000e+00> : vector<8x128xf32>
    %151 = tpu.matmul %140, %0, %cst_52 {dimension_numbers = #tpu.dot_dimension_numbers<[1], [0], [0], [1], [0, 0, 1, 1], [], []>} : vector<8x32xf32>, vector<32x128xf32>, vector<8x128xf32> -> vector<8x128xf32>
    %152 = arith.addf %150, %151 : vector<8x128xf32>
    %153 = math.tanh %152 : vector<8x128xf32>
    %154 = arith.negf %152 : vector<8x128xf32>
    %155 = math.exp %154 : vector<8x128xf32>
    %cst_53 = arith.constant 1.000000e+00 : f32
    %156 = vector.broadcast %cst_53 : f32 to vector<8x128xf32>
    %157 = arith.addf %156, %155 : vector<8x128xf32>
    %158 = arith.divf %156, %157 : vector<8x128xf32>
    %159 = arith.select %6, %153, %158 : vector<8x128xi1>, vector<8x128xf32>
    %160 = vector.extract_strided_slice %159 {offsets = [0, 0], sizes = [8, 32], strides = [1, 1]} : vector<8x128xf32> to vector<8x32xf32>
    %161 = vector.extract_strided_slice %159 {offsets = [0, 32], sizes = [8, 32], strides = [1, 1]} : vector<8x128xf32> to vector<8x32xf32>
    %162 = vector.extract_strided_slice %159 {offsets = [0, 64], sizes = [8, 32], strides = [1, 1]} : vector<8x128xf32> to vector<8x32xf32>
    %163 = vector.extract_strided_slice %159 {offsets = [0, 96], sizes = [8, 32], strides = [1, 1]} : vector<8x128xf32> to vector<8x32xf32>
    %164 = arith.mulf %161, %138 : vector<8x32xf32>
    %165 = arith.mulf %160, %162 : vector<8x32xf32>
    %166 = arith.addf %164, %165 : vector<8x32xf32>
    %167 = math.tanh %166 : vector<8x32xf32>
    %168 = arith.mulf %163, %167 : vector<8x32xf32>
    %169 = vector.extract_strided_slice %168 {offsets = [0, 0], sizes = [8, 16], strides = [1, 1]} : vector<8x32xf32> to vector<8x16xf32>
    %c5_54 = arith.constant 5 : index
    %c0_55 = arith.constant 0 : index
    %c0_56 = arith.constant 0 : index
    %170 = vector.load %arg8[%c5_54, %c0_55, %c0_56] : memref<8x8x32xf32, #tpu.memory_space<vmem>>, vector<1x8x16xf32>
    %171 = vector.shape_cast %170 : vector<1x8x16xf32> to vector<8x16xf32>
    %172 = vector.shape_cast %169 : vector<8x16xf32> to vector<1x8x16xf32>
    tpu.vector_store %arg8[%c5_54, %c0_55, %c0_56], %172 {strides = array<i32>} : memref<8x8x32xf32, #tpu.memory_space<vmem>>, vector<1x8x16xf32>,
    %173 = vector.extract_strided_slice %168 {offsets = [0, 16], sizes = [8, 16], strides = [1, 1]} : vector<8x32xf32> to vector<8x16xf32>
    %c2_57 = arith.constant 2 : index
    %c0_58 = arith.constant 0 : index
    %c16_59 = arith.constant 16 : index
    %174 = vector.load %arg8[%c2_57, %c0_58, %c16_59] : memref<8x8x32xf32, #tpu.memory_space<vmem>>, vector<1x8x16xf32>
    %175 = vector.shape_cast %174 : vector<1x8x16xf32> to vector<8x16xf32>
    %176 = vector.shape_cast %173 : vector<8x16xf32> to vector<1x8x16xf32>
    tpu.vector_store %arg8[%c2_57, %c0_58, %c16_59], %176 {strides = array<i32>} : memref<8x8x32xf32, #tpu.memory_space<vmem>>, vector<1x8x16xf32>,
    %c6_60 = arith.constant 6 : index
    %c0_61 = arith.constant 0 : index
    %c0_62 = arith.constant 0 : index
    %177 = vector.load %arg0[%c6_60, %c0_61, %c0_62] : memref<8x8x128xf32, #tpu.memory_space<vmem>>, vector<1x8x128xf32>
    %178 = vector.shape_cast %177 : vector<1x8x128xf32> to vector<8x128xf32>
    %cst_63 = arith.constant dense<0.000000e+00> : vector<8x128xf32>
    %179 = tpu.matmul %168, %0, %cst_63 {dimension_numbers = #tpu.dot_dimension_numbers<[1], [0], [0], [1], [0, 0, 1, 1], [], []>} : vector<8x32xf32>, vector<32x128xf32>, vector<8x128xf32> -> vector<8x128xf32>
    %180 = arith.addf %178, %179 : vector<8x128xf32>
    %181 = math.tanh %180 : vector<8x128xf32>
    %182 = arith.negf %180 : vector<8x128xf32>
    %183 = math.exp %182 : vector<8x128xf32>
    %cst_64 = arith.constant 1.000000e+00 : f32
    %184 = vector.broadcast %cst_64 : f32 to vector<8x128xf32>
    %185 = arith.addf %184, %183 : vector<8x128xf32>
    %186 = arith.divf %184, %185 : vector<8x128xf32>
    %187 = arith.select %6, %181, %186 : vector<8x128xi1>, vector<8x128xf32>
    %188 = vector.extract_strided_slice %187 {offsets = [0, 0], sizes = [8, 32], strides = [1, 1]} : vector<8x128xf32> to vector<8x32xf32>
    %189 = vector.extract_strided_slice %187 {offsets = [0, 32], sizes = [8, 32], strides = [1, 1]} : vector<8x128xf32> to vector<8x32xf32>
    %190 = vector.extract_strided_slice %187 {offsets = [0, 64], sizes = [8, 32], strides = [1, 1]} : vector<8x128xf32> to vector<8x32xf32>
    %191 = vector.extract_strided_slice %187 {offsets = [0, 96], sizes = [8, 32], strides = [1, 1]} : vector<8x128xf32> to vector<8x32xf32>
    %192 = arith.mulf %189, %166 : vector<8x32xf32>
    %193 = arith.mulf %188, %190 : vector<8x32xf32>
    %194 = arith.addf %192, %193 : vector<8x32xf32>
    %195 = math.tanh %194 : vector<8x32xf32>
    %196 = arith.mulf %191, %195 : vector<8x32xf32>
    %197 = vector.extract_strided_slice %196 {offsets = [0, 0], sizes = [8, 16], strides = [1, 1]} : vector<8x32xf32> to vector<8x16xf32>
    %c6_65 = arith.constant 6 : index
    %c0_66 = arith.constant 0 : index
    %c0_67 = arith.constant 0 : index
    %198 = vector.load %arg8[%c6_65, %c0_66, %c0_67] : memref<8x8x32xf32, #tpu.memory_space<vmem>>, vector<1x8x16xf32>
    %199 = vector.shape_cast %198 : vector<1x8x16xf32> to vector<8x16xf32>
    %200 = vector.shape_cast %197 : vector<8x16xf32> to vector<1x8x16xf32>
    tpu.vector_store %arg8[%c6_65, %c0_66, %c0_67], %200 {strides = array<i32>} : memref<8x8x32xf32, #tpu.memory_space<vmem>>, vector<1x8x16xf32>,
    %201 = vector.extract_strided_slice %196 {offsets = [0, 16], sizes = [8, 16], strides = [1, 1]} : vector<8x32xf32> to vector<8x16xf32>
    %c1_68 = arith.constant 1 : index
    %c0_69 = arith.constant 0 : index
    %c16_70 = arith.constant 16 : index
    %202 = vector.load %arg8[%c1_68, %c0_69, %c16_70] : memref<8x8x32xf32, #tpu.memory_space<vmem>>, vector<1x8x16xf32>
    %203 = vector.shape_cast %202 : vector<1x8x16xf32> to vector<8x16xf32>
    %204 = vector.shape_cast %201 : vector<8x16xf32> to vector<1x8x16xf32>
    tpu.vector_store %arg8[%c1_68, %c0_69, %c16_70], %204 {strides = array<i32>} : memref<8x8x32xf32, #tpu.memory_space<vmem>>, vector<1x8x16xf32>,
    %c7_71 = arith.constant 7 : index
    %c0_72 = arith.constant 0 : index
    %c0_73 = arith.constant 0 : index
    %205 = vector.load %arg0[%c7_71, %c0_72, %c0_73] : memref<8x8x128xf32, #tpu.memory_space<vmem>>, vector<1x8x128xf32>
    %206 = vector.shape_cast %205 : vector<1x8x128xf32> to vector<8x128xf32>
    %cst_74 = arith.constant dense<0.000000e+00> : vector<8x128xf32>
    %207 = tpu.matmul %196, %0, %cst_74 {dimension_numbers = #tpu.dot_dimension_numbers<[1], [0], [0], [1], [0, 0, 1, 1], [], []>} : vector<8x32xf32>, vector<32x128xf32>, vector<8x128xf32> -> vector<8x128xf32>
    %208 = arith.addf %206, %207 : vector<8x128xf32>
    %209 = math.tanh %208 : vector<8x128xf32>
    %210 = arith.negf %208 : vector<8x128xf32>
    %211 = math.exp %210 : vector<8x128xf32>
    %cst_75 = arith.constant 1.000000e+00 : f32
    %212 = vector.broadcast %cst_75 : f32 to vector<8x128xf32>
    %213 = arith.addf %212, %211 : vector<8x128xf32>
    %214 = arith.divf %212, %213 : vector<8x128xf32>
    %215 = arith.select %6, %209, %214 : vector<8x128xi1>, vector<8x128xf32>
    %216 = vector.extract_strided_slice %215 {offsets = [0, 0], sizes = [8, 32], strides = [1, 1]} : vector<8x128xf32> to vector<8x32xf32>
    %217 = vector.extract_strided_slice %215 {offsets = [0, 32], sizes = [8, 32], strides = [1, 1]} : vector<8x128xf32> to vector<8x32xf32>
    %218 = vector.extract_strided_slice %215 {offsets = [0, 64], sizes = [8, 32], strides = [1, 1]} : vector<8x128xf32> to vector<8x32xf32>
    %219 = vector.extract_strided_slice %215 {offsets = [0, 96], sizes = [8, 32], strides = [1, 1]} : vector<8x128xf32> to vector<8x32xf32>
    %220 = arith.mulf %217, %194 : vector<8x32xf32>
    %221 = arith.mulf %216, %218 : vector<8x32xf32>
    %222 = arith.addf %220, %221 : vector<8x32xf32>
    %223 = math.tanh %222 : vector<8x32xf32>
    %224 = arith.mulf %219, %223 : vector<8x32xf32>
    %225 = vector.extract_strided_slice %224 {offsets = [0, 0], sizes = [8, 16], strides = [1, 1]} : vector<8x32xf32> to vector<8x16xf32>
    %c7_76 = arith.constant 7 : index
    %c0_77 = arith.constant 0 : index
    %c0_78 = arith.constant 0 : index
    %226 = vector.load %arg8[%c7_76, %c0_77, %c0_78] : memref<8x8x32xf32, #tpu.memory_space<vmem>>, vector<1x8x16xf32>
    %227 = vector.shape_cast %226 : vector<1x8x16xf32> to vector<8x16xf32>
    %228 = vector.shape_cast %225 : vector<8x16xf32> to vector<1x8x16xf32>
    tpu.vector_store %arg8[%c7_76, %c0_77, %c0_78], %228 {strides = array<i32>} : memref<8x8x32xf32, #tpu.memory_space<vmem>>, vector<1x8x16xf32>,
    %229 = vector.extract_strided_slice %224 {offsets = [0, 16], sizes = [8, 16], strides = [1, 1]} : vector<8x32xf32> to vector<8x16xf32>
    %c0_79 = arith.constant 0 : index
    %c0_80 = arith.constant 0 : index
    %c16_81 = arith.constant 16 : index
    %230 = vector.load %arg8[%c0_79, %c0_80, %c16_81] : memref<8x8x32xf32, #tpu.memory_space<vmem>>, vector<1x8x16xf32>
    %231 = vector.shape_cast %230 : vector<1x8x16xf32> to vector<8x16xf32>
    %232 = vector.shape_cast %229 : vector<8x16xf32> to vector<1x8x16xf32>
    tpu.vector_store %arg8[%c0_79, %c0_80, %c16_81], %232 {strides = array<i32>} : memref<8x8x32xf32, #tpu.memory_space<vmem>>, vector<1x8x16xf32>,
    %233 = tpu.iota {dimensions = array<i32: 1>} : vector<8x128xi32>
    %c64_i32_82 = arith.constant 64 : i32
    %234 = vector.broadcast %c64_i32_82 : i32 to vector<8x128xi32>
    %235 = arith.cmpi sge, %233, %234 : vector<8x128xi32>
    %c96_i32_83 = arith.constant 96 : i32
    %236 = vector.broadcast %c96_i32_83 : i32 to vector<8x128xi32>
    %237 = arith.cmpi slt, %233, %236 : vector<8x128xi32>
    %238 = arith.andi %235, %237 : vector<8x128xi1>
    %c0_84 = arith.constant 0 : index
    %c0_85 = arith.constant 0 : index
    %c0_86 = arith.constant 0 : index
    %239 = vector.load %arg8[%c0_84, %c0_85, %c0_86] : memref<8x8x32xf32, #tpu.memory_space<vmem>>, vector<8x8x32xf32>
    %c0_87 = arith.constant 0 : index
    %c0_88 = arith.constant 0 : index
    %c0_89 = arith.constant 0 : index
    %240 = vector.load %arg2[%c0_87, %c0_88, %c0_89] : memref<2x32x128xf32, #tpu.memory_space<vmem>>, vector<1x32x128xf32>
    %241 = vector.shape_cast %240 : vector<1x32x128xf32> to vector<32x128xf32>
    %c0_90 = arith.constant 0 : index
    %c0_91 = arith.constant 0 : index
    %c0_92 = arith.constant 0 : index
    %242 = vector.load %arg3[%c0_90, %c0_91, %c0_92] : memref<2x32x128xf32, #tpu.memory_space<vmem>>, vector<1x32x128xf32>
    %243 = vector.shape_cast %242 : vector<1x32x128xf32> to vector<32x128xf32>
    %c0_93 = arith.constant 0 : index
    %c0_94 = arith.constant 0 : index
    %c0_95 = arith.constant 0 : index
    %244 = vector.load %arg4[%c0_93, %c0_94, %c0_95] : memref<2x1x128xf32, #tpu.memory_space<vmem>>, vector<1x1x128xf32>
    %245 = vector.shape_cast %244 : vector<1x1x128xf32> to vector<1x128xf32>
    %246 = vector.shape_cast %239 : vector<8x8x32xf32> to vector<64x32xf32>
    %cst_96 = arith.constant dense<0.000000e+00> : vector<64x128xf32>
    %247 = tpu.matmul %246, %241, %cst_96 {dimension_numbers = #tpu.dot_dimension_numbers<[1], [0], [0], [1], [0, 0, 1, 1], [], []>} : vector<64x32xf32>, vector<32x128xf32>, vector<64x128xf32> -> vector<64x128xf32>
    %248 = vector.broadcast %245 : vector<1x128xf32> to vector<64x128xf32>
    %249 = arith.addf %247, %248 : vector<64x128xf32>
    %cst_97 = arith.constant 0.000000e+00 : f32
    %250 = vector.broadcast %cst_97 : f32 to vector<8x32xf32>
    %cst_98 = arith.constant 0.000000e+00 : f32
    %251 = vector.broadcast %cst_98 : f32 to vector<8x32xf32>
    %252 = vector.extract_strided_slice %249 {offsets = [0, 0], sizes = [8, 128], strides = [1, 1]} : vector<64x128xf32> to vector<8x128xf32>
    %cst_99 = arith.constant dense<0.000000e+00> : vector<8x128xf32>
    %253 = tpu.matmul %250, %243, %cst_99 {dimension_numbers = #tpu.dot_dimension_numbers<[1], [0], [0], [1], [0, 0, 1, 1], [], []>} : vector<8x32xf32>, vector<32x128xf32>, vector<8x128xf32> -> vector<8x128xf32>
    %254 = arith.addf %252, %253 : vector<8x128xf32>
    %255 = math.tanh %254 : vector<8x128xf32>
    %256 = arith.negf %254 : vector<8x128xf32>
    %257 = math.exp %256 : vector<8x128xf32>
    %cst_100 = arith.constant 1.000000e+00 : f32
    %258 = vector.broadcast %cst_100 : f32 to vector<8x128xf32>
    %259 = arith.addf %258, %257 : vector<8x128xf32>
    %260 = arith.divf %258, %259 : vector<8x128xf32>
    %261 = arith.select %238, %255, %260 : vector<8x128xi1>, vector<8x128xf32>
    %262 = vector.extract_strided_slice %261 {offsets = [0, 0], sizes = [8, 32], strides = [1, 1]} : vector<8x128xf32> to vector<8x32xf32>
    %263 = vector.extract_strided_slice %261 {offsets = [0, 32], sizes = [8, 32], strides = [1, 1]} : vector<8x128xf32> to vector<8x32xf32>
    %264 = vector.extract_strided_slice %261 {offsets = [0, 64], sizes = [8, 32], strides = [1, 1]} : vector<8x128xf32> to vector<8x32xf32>
    %265 = vector.extract_strided_slice %261 {offsets = [0, 96], sizes = [8, 32], strides = [1, 1]} : vector<8x128xf32> to vector<8x32xf32>
    %266 = arith.mulf %263, %251 : vector<8x32xf32>
    %267 = arith.mulf %262, %264 : vector<8x32xf32>
    %268 = arith.addf %266, %267 : vector<8x32xf32>
    %269 = math.tanh %268 : vector<8x32xf32>
    %270 = arith.mulf %265, %269 : vector<8x32xf32>
    %c0_101 = arith.constant 0 : index
    %c0_102 = arith.constant 0 : index
    %c0_103 = arith.constant 0 : index
    %271 = vector.load %arg5[%c0_101, %c0_102, %c0_103] : memref<8x8x32xf32, #tpu.memory_space<vmem>>, vector<1x8x32xf32>
    %272 = vector.shape_cast %271 : vector<1x8x32xf32> to vector<8x32xf32>
    %273 = vector.shape_cast %270 : vector<8x32xf32> to vector<1x8x32xf32>
    tpu.vector_store %arg5[%c0_101, %c0_102, %c0_103], %273 {strides = array<i32>} : memref<8x8x32xf32, #tpu.memory_space<vmem>>, vector<1x8x32xf32>,
    %274 = vector.extract_strided_slice %249 {offsets = [8, 0], sizes = [8, 128], strides = [1, 1]} : vector<64x128xf32> to vector<8x128xf32>
    %cst_104 = arith.constant dense<0.000000e+00> : vector<8x128xf32>
    %275 = tpu.matmul %270, %243, %cst_104 {dimension_numbers = #tpu.dot_dimension_numbers<[1], [0], [0], [1], [0, 0, 1, 1], [], []>} : vector<8x32xf32>, vector<32x128xf32>, vector<8x128xf32> -> vector<8x128xf32>
    %276 = arith.addf %274, %275 : vector<8x128xf32>
    %277 = math.tanh %276 : vector<8x128xf32>
    %278 = arith.negf %276 : vector<8x128xf32>
    %279 = math.exp %278 : vector<8x128xf32>
    %cst_105 = arith.constant 1.000000e+00 : f32
    %280 = vector.broadcast %cst_105 : f32 to vector<8x128xf32>
    %281 = arith.addf %280, %279 : vector<8x128xf32>
    %282 = arith.divf %280, %281 : vector<8x128xf32>
    %283 = arith.select %238, %277, %282 : vector<8x128xi1>, vector<8x128xf32>
    %284 = vector.extract_strided_slice %283 {offsets = [0, 0], sizes = [8, 32], strides = [1, 1]} : vector<8x128xf32> to vector<8x32xf32>
    %285 = vector.extract_strided_slice %283 {offsets = [0, 32], sizes = [8, 32], strides = [1, 1]} : vector<8x128xf32> to vector<8x32xf32>
    %286 = vector.extract_strided_slice %283 {offsets = [0, 64], sizes = [8, 32], strides = [1, 1]} : vector<8x128xf32> to vector<8x32xf32>
    %287 = vector.extract_strided_slice %283 {offsets = [0, 96], sizes = [8, 32], strides = [1, 1]} : vector<8x128xf32> to vector<8x32xf32>
    %288 = arith.mulf %285, %268 : vector<8x32xf32>
    %289 = arith.mulf %284, %286 : vector<8x32xf32>
    %290 = arith.addf %288, %289 : vector<8x32xf32>
    %291 = math.tanh %290 : vector<8x32xf32>
    %292 = arith.mulf %287, %291 : vector<8x32xf32>
    %c1_106 = arith.constant 1 : index
    %c0_107 = arith.constant 0 : index
    %c0_108 = arith.constant 0 : index
    %293 = vector.load %arg5[%c1_106, %c0_107, %c0_108] : memref<8x8x32xf32, #tpu.memory_space<vmem>>, vector<1x8x32xf32>
    %294 = vector.shape_cast %293 : vector<1x8x32xf32> to vector<8x32xf32>
    %295 = vector.shape_cast %292 : vector<8x32xf32> to vector<1x8x32xf32>
    tpu.vector_store %arg5[%c1_106, %c0_107, %c0_108], %295 {strides = array<i32>} : memref<8x8x32xf32, #tpu.memory_space<vmem>>, vector<1x8x32xf32>,
    %296 = vector.extract_strided_slice %249 {offsets = [16, 0], sizes = [8, 128], strides = [1, 1]} : vector<64x128xf32> to vector<8x128xf32>
    %cst_109 = arith.constant dense<0.000000e+00> : vector<8x128xf32>
    %297 = tpu.matmul %292, %243, %cst_109 {dimension_numbers = #tpu.dot_dimension_numbers<[1], [0], [0], [1], [0, 0, 1, 1], [], []>} : vector<8x32xf32>, vector<32x128xf32>, vector<8x128xf32> -> vector<8x128xf32>
    %298 = arith.addf %296, %297 : vector<8x128xf32>
    %299 = math.tanh %298 : vector<8x128xf32>
    %300 = arith.negf %298 : vector<8x128xf32>
    %301 = math.exp %300 : vector<8x128xf32>
    %cst_110 = arith.constant 1.000000e+00 : f32
    %302 = vector.broadcast %cst_110 : f32 to vector<8x128xf32>
    %303 = arith.addf %302, %301 : vector<8x128xf32>
    %304 = arith.divf %302, %303 : vector<8x128xf32>
    %305 = arith.select %238, %299, %304 : vector<8x128xi1>, vector<8x128xf32>
    %306 = vector.extract_strided_slice %305 {offsets = [0, 0], sizes = [8, 32], strides = [1, 1]} : vector<8x128xf32> to vector<8x32xf32>
    %307 = vector.extract_strided_slice %305 {offsets = [0, 32], sizes = [8, 32], strides = [1, 1]} : vector<8x128xf32> to vector<8x32xf32>
    %308 = vector.extract_strided_slice %305 {offsets = [0, 64], sizes = [8, 32], strides = [1, 1]} : vector<8x128xf32> to vector<8x32xf32>
    %309 = vector.extract_strided_slice %305 {offsets = [0, 96], sizes = [8, 32], strides = [1, 1]} : vector<8x128xf32> to vector<8x32xf32>
    %310 = arith.mulf %307, %290 : vector<8x32xf32>
    %311 = arith.mulf %306, %308 : vector<8x32xf32>
    %312 = arith.addf %310, %311 : vector<8x32xf32>
    %313 = math.tanh %312 : vector<8x32xf32>
    %314 = arith.mulf %309, %313 : vector<8x32xf32>
    %c2_111 = arith.constant 2 : index
    %c0_112 = arith.constant 0 : index
    %c0_113 = arith.constant 0 : index
    %315 = vector.load %arg5[%c2_111, %c0_112, %c0_113] : memref<8x8x32xf32, #tpu.memory_space<vmem>>, vector<1x8x32xf32>
    %316 = vector.shape_cast %315 : vector<1x8x32xf32> to vector<8x32xf32>
    %317 = vector.shape_cast %314 : vector<8x32xf32> to vector<1x8x32xf32>
    tpu.vector_store %arg5[%c2_111, %c0_112, %c0_113], %317 {strides = array<i32>} : memref<8x8x32xf32, #tpu.memory_space<vmem>>, vector<1x8x32xf32>,
    %318 = vector.extract_strided_slice %249 {offsets = [24, 0], sizes = [8, 128], strides = [1, 1]} : vector<64x128xf32> to vector<8x128xf32>
    %cst_114 = arith.constant dense<0.000000e+00> : vector<8x128xf32>
    %319 = tpu.matmul %314, %243, %cst_114 {dimension_numbers = #tpu.dot_dimension_numbers<[1], [0], [0], [1], [0, 0, 1, 1], [], []>} : vector<8x32xf32>, vector<32x128xf32>, vector<8x128xf32> -> vector<8x128xf32>
    %320 = arith.addf %318, %319 : vector<8x128xf32>
    %321 = math.tanh %320 : vector<8x128xf32>
    %322 = arith.negf %320 : vector<8x128xf32>
    %323 = math.exp %322 : vector<8x128xf32>
    %cst_115 = arith.constant 1.000000e+00 : f32
    %324 = vector.broadcast %cst_115 : f32 to vector<8x128xf32>
    %325 = arith.addf %324, %323 : vector<8x128xf32>
    %326 = arith.divf %324, %325 : vector<8x128xf32>
    %327 = arith.select %238, %321, %326 : vector<8x128xi1>, vector<8x128xf32>
    %328 = vector.extract_strided_slice %327 {offsets = [0, 0], sizes = [8, 32], strides = [1, 1]} : vector<8x128xf32> to vector<8x32xf32>
    %329 = vector.extract_strided_slice %327 {offsets = [0, 32], sizes = [8, 32], strides = [1, 1]} : vector<8x128xf32> to vector<8x32xf32>
    %330 = vector.extract_strided_slice %327 {offsets = [0, 64], sizes = [8, 32], strides = [1, 1]} : vector<8x128xf32> to vector<8x32xf32>
    %331 = vector.extract_strided_slice %327 {offsets = [0, 96], sizes = [8, 32], strides = [1, 1]} : vector<8x128xf32> to vector<8x32xf32>
    %332 = arith.mulf %329, %312 : vector<8x32xf32>
    %333 = arith.mulf %328, %330 : vector<8x32xf32>
    %334 = arith.addf %332, %333 : vector<8x32xf32>
    %335 = math.tanh %334 : vector<8x32xf32>
    %336 = arith.mulf %331, %335 : vector<8x32xf32>
    %c3_116 = arith.constant 3 : index
    %c0_117 = arith.constant 0 : index
    %c0_118 = arith.constant 0 : index
    %337 = vector.load %arg5[%c3_116, %c0_117, %c0_118] : memref<8x8x32xf32, #tpu.memory_space<vmem>>, vector<1x8x32xf32>
    %338 = vector.shape_cast %337 : vector<1x8x32xf32> to vector<8x32xf32>
    %339 = vector.shape_cast %336 : vector<8x32xf32> to vector<1x8x32xf32>
    tpu.vector_store %arg5[%c3_116, %c0_117, %c0_118], %339 {strides = array<i32>} : memref<8x8x32xf32, #tpu.memory_space<vmem>>, vector<1x8x32xf32>,
    %340 = vector.extract_strided_slice %249 {offsets = [32, 0], sizes = [8, 128], strides = [1, 1]} : vector<64x128xf32> to vector<8x128xf32>
    %cst_119 = arith.constant dense<0.000000e+00> : vector<8x128xf32>
    %341 = tpu.matmul %336, %243, %cst_119 {dimension_numbers = #tpu.dot_dimension_numbers<[1], [0], [0], [1], [0, 0, 1, 1], [], []>} : vector<8x32xf32>, vector<32x128xf32>, vector<8x128xf32> -> vector<8x128xf32>
    %342 = arith.addf %340, %341 : vector<8x128xf32>
    %343 = math.tanh %342 : vector<8x128xf32>
    %344 = arith.negf %342 : vector<8x128xf32>
    %345 = math.exp %344 : vector<8x128xf32>
    %cst_120 = arith.constant 1.000000e+00 : f32
    %346 = vector.broadcast %cst_120 : f32 to vector<8x128xf32>
    %347 = arith.addf %346, %345 : vector<8x128xf32>
    %348 = arith.divf %346, %347 : vector<8x128xf32>
    %349 = arith.select %238, %343, %348 : vector<8x128xi1>, vector<8x128xf32>
    %350 = vector.extract_strided_slice %349 {offsets = [0, 0], sizes = [8, 32], strides = [1, 1]} : vector<8x128xf32> to vector<8x32xf32>
    %351 = vector.extract_strided_slice %349 {offsets = [0, 32], sizes = [8, 32], strides = [1, 1]} : vector<8x128xf32> to vector<8x32xf32>
    %352 = vector.extract_strided_slice %349 {offsets = [0, 64], sizes = [8, 32], strides = [1, 1]} : vector<8x128xf32> to vector<8x32xf32>
    %353 = vector.extract_strided_slice %349 {offsets = [0, 96], sizes = [8, 32], strides = [1, 1]} : vector<8x128xf32> to vector<8x32xf32>
    %354 = arith.mulf %351, %334 : vector<8x32xf32>
    %355 = arith.mulf %350, %352 : vector<8x32xf32>
    %356 = arith.addf %354, %355 : vector<8x32xf32>
    %357 = math.tanh %356 : vector<8x32xf32>
    %358 = arith.mulf %353, %357 : vector<8x32xf32>
    %c4_121 = arith.constant 4 : index
    %c0_122 = arith.constant 0 : index
    %c0_123 = arith.constant 0 : index
    %359 = vector.load %arg5[%c4_121, %c0_122, %c0_123] : memref<8x8x32xf32, #tpu.memory_space<vmem>>, vector<1x8x32xf32>
    %360 = vector.shape_cast %359 : vector<1x8x32xf32> to vector<8x32xf32>
    %361 = vector.shape_cast %358 : vector<8x32xf32> to vector<1x8x32xf32>
    tpu.vector_store %arg5[%c4_121, %c0_122, %c0_123], %361 {strides = array<i32>} : memref<8x8x32xf32, #tpu.memory_space<vmem>>, vector<1x8x32xf32>,
    %362 = vector.extract_strided_slice %249 {offsets = [40, 0], sizes = [8, 128], strides = [1, 1]} : vector<64x128xf32> to vector<8x128xf32>
    %cst_124 = arith.constant dense<0.000000e+00> : vector<8x128xf32>
    %363 = tpu.matmul %358, %243, %cst_124 {dimension_numbers = #tpu.dot_dimension_numbers<[1], [0], [0], [1], [0, 0, 1, 1], [], []>} : vector<8x32xf32>, vector<32x128xf32>, vector<8x128xf32> -> vector<8x128xf32>
    %364 = arith.addf %362, %363 : vector<8x128xf32>
    %365 = math.tanh %364 : vector<8x128xf32>
    %366 = arith.negf %364 : vector<8x128xf32>
    %367 = math.exp %366 : vector<8x128xf32>
    %cst_125 = arith.constant 1.000000e+00 : f32
    %368 = vector.broadcast %cst_125 : f32 to vector<8x128xf32>
    %369 = arith.addf %368, %367 : vector<8x128xf32>
    %370 = arith.divf %368, %369 : vector<8x128xf32>
    %371 = arith.select %238, %365, %370 : vector<8x128xi1>, vector<8x128xf32>
    %372 = vector.extract_strided_slice %371 {offsets = [0, 0], sizes = [8, 32], strides = [1, 1]} : vector<8x128xf32> to vector<8x32xf32>
    %373 = vector.extract_strided_slice %371 {offsets = [0, 32], sizes = [8, 32], strides = [1, 1]} : vector<8x128xf32> to vector<8x32xf32>
    %374 = vector.extract_strided_slice %371 {offsets = [0, 64], sizes = [8, 32], strides = [1, 1]} : vector<8x128xf32> to vector<8x32xf32>
    %375 = vector.extract_strided_slice %371 {offsets = [0, 96], sizes = [8, 32], strides = [1, 1]} : vector<8x128xf32> to vector<8x32xf32>
    %376 = arith.mulf %373, %356 : vector<8x32xf32>
    %377 = arith.mulf %372, %374 : vector<8x32xf32>
    %378 = arith.addf %376, %377 : vector<8x32xf32>
    %379 = math.tanh %378 : vector<8x32xf32>
    %380 = arith.mulf %375, %379 : vector<8x32xf32>
    %c5_126 = arith.constant 5 : index
    %c0_127 = arith.constant 0 : index
    %c0_128 = arith.constant 0 : index
    %381 = vector.load %arg5[%c5_126, %c0_127, %c0_128] : memref<8x8x32xf32, #tpu.memory_space<vmem>>, vector<1x8x32xf32>
    %382 = vector.shape_cast %381 : vector<1x8x32xf32> to vector<8x32xf32>
    %383 = vector.shape_cast %380 : vector<8x32xf32> to vector<1x8x32xf32>
    tpu.vector_store %arg5[%c5_126, %c0_127, %c0_128], %383 {strides = array<i32>} : memref<8x8x32xf32, #tpu.memory_space<vmem>>, vector<1x8x32xf32>,
    %384 = vector.extract_strided_slice %249 {offsets = [48, 0], sizes = [8, 128], strides = [1, 1]} : vector<64x128xf32> to vector<8x128xf32>
    %cst_129 = arith.constant dense<0.000000e+00> : vector<8x128xf32>
    %385 = tpu.matmul %380, %243, %cst_129 {dimension_numbers = #tpu.dot_dimension_numbers<[1], [0], [0], [1], [0, 0, 1, 1], [], []>} : vector<8x32xf32>, vector<32x128xf32>, vector<8x128xf32> -> vector<8x128xf32>
    %386 = arith.addf %384, %385 : vector<8x128xf32>
    %387 = math.tanh %386 : vector<8x128xf32>
    %388 = arith.negf %386 : vector<8x128xf32>
    %389 = math.exp %388 : vector<8x128xf32>
    %cst_130 = arith.constant 1.000000e+00 : f32
    %390 = vector.broadcast %cst_130 : f32 to vector<8x128xf32>
    %391 = arith.addf %390, %389 : vector<8x128xf32>
    %392 = arith.divf %390, %391 : vector<8x128xf32>
    %393 = arith.select %238, %387, %392 : vector<8x128xi1>, vector<8x128xf32>
    %394 = vector.extract_strided_slice %393 {offsets = [0, 0], sizes = [8, 32], strides = [1, 1]} : vector<8x128xf32> to vector<8x32xf32>
    %395 = vector.extract_strided_slice %393 {offsets = [0, 32], sizes = [8, 32], strides = [1, 1]} : vector<8x128xf32> to vector<8x32xf32>
    %396 = vector.extract_strided_slice %393 {offsets = [0, 64], sizes = [8, 32], strides = [1, 1]} : vector<8x128xf32> to vector<8x32xf32>
    %397 = vector.extract_strided_slice %393 {offsets = [0, 96], sizes = [8, 32], strides = [1, 1]} : vector<8x128xf32> to vector<8x32xf32>
    %398 = arith.mulf %395, %378 : vector<8x32xf32>
    %399 = arith.mulf %394, %396 : vector<8x32xf32>
    %400 = arith.addf %398, %399 : vector<8x32xf32>
    %401 = math.tanh %400 : vector<8x32xf32>
    %402 = arith.mulf %397, %401 : vector<8x32xf32>
    %c6_131 = arith.constant 6 : index
    %c0_132 = arith.constant 0 : index
    %c0_133 = arith.constant 0 : index
    %403 = vector.load %arg5[%c6_131, %c0_132, %c0_133] : memref<8x8x32xf32, #tpu.memory_space<vmem>>, vector<1x8x32xf32>
    %404 = vector.shape_cast %403 : vector<1x8x32xf32> to vector<8x32xf32>
    %405 = vector.shape_cast %402 : vector<8x32xf32> to vector<1x8x32xf32>
    tpu.vector_store %arg5[%c6_131, %c0_132, %c0_133], %405 {strides = array<i32>} : memref<8x8x32xf32, #tpu.memory_space<vmem>>, vector<1x8x32xf32>,
    %406 = vector.extract_strided_slice %249 {offsets = [56, 0], sizes = [8, 128], strides = [1, 1]} : vector<64x128xf32> to vector<8x128xf32>
    %cst_134 = arith.constant dense<0.000000e+00> : vector<8x128xf32>
    %407 = tpu.matmul %402, %243, %cst_134 {dimension_numbers = #tpu.dot_dimension_numbers<[1], [0], [0], [1], [0, 0, 1, 1], [], []>} : vector<8x32xf32>, vector<32x128xf32>, vector<8x128xf32> -> vector<8x128xf32>
    %408 = arith.addf %406, %407 : vector<8x128xf32>
    %409 = math.tanh %408 : vector<8x128xf32>
    %410 = arith.negf %408 : vector<8x128xf32>
    %411 = math.exp %410 : vector<8x128xf32>
    %cst_135 = arith.constant 1.000000e+00 : f32
    %412 = vector.broadcast %cst_135 : f32 to vector<8x128xf32>
    %413 = arith.addf %412, %411 : vector<8x128xf32>
    %414 = arith.divf %412, %413 : vector<8x128xf32>
    %415 = arith.select %238, %409, %414 : vector<8x128xi1>, vector<8x128xf32>
    %416 = vector.extract_strided_slice %415 {offsets = [0, 0], sizes = [8, 32], strides = [1, 1]} : vector<8x128xf32> to vector<8x32xf32>
    %417 = vector.extract_strided_slice %415 {offsets = [0, 32], sizes = [8, 32], strides = [1, 1]} : vector<8x128xf32> to vector<8x32xf32>
    %418 = vector.extract_strided_slice %415 {offsets = [0, 64], sizes = [8, 32], strides = [1, 1]} : vector<8x128xf32> to vector<8x32xf32>
    %419 = vector.extract_strided_slice %415 {offsets = [0, 96], sizes = [8, 32], strides = [1, 1]} : vector<8x128xf32> to vector<8x32xf32>
    %420 = arith.mulf %417, %400 : vector<8x32xf32>
    %421 = arith.mulf %416, %418 : vector<8x32xf32>
    %422 = arith.addf %420, %421 : vector<8x32xf32>
    %423 = math.tanh %422 : vector<8x32xf32>
    %424 = arith.mulf %419, %423 : vector<8x32xf32>
    %c7_136 = arith.constant 7 : index
    %c0_137 = arith.constant 0 : index
    %c0_138 = arith.constant 0 : index
    %425 = vector.load %arg5[%c7_136, %c0_137, %c0_138] : memref<8x8x32xf32, #tpu.memory_space<vmem>>, vector<1x8x32xf32>
    %426 = vector.shape_cast %425 : vector<1x8x32xf32> to vector<8x32xf32>
    %427 = vector.shape_cast %424 : vector<8x32xf32> to vector<1x8x32xf32>
    tpu.vector_store %arg5[%c7_136, %c0_137, %c0_138], %427 {strides = array<i32>} : memref<8x8x32xf32, #tpu.memory_space<vmem>>, vector<1x8x32xf32>,
    %c0_139 = arith.constant 0 : index
    %c0_140 = arith.constant 0 : index
    %c0_141 = arith.constant 0 : index
    %428 = vector.load %arg6[%c0_139, %c0_140, %c0_141] : memref<2x8x32xf32, #tpu.memory_space<vmem>>, vector<1x8x32xf32>
    %429 = vector.shape_cast %428 : vector<1x8x32xf32> to vector<8x32xf32>
    %430 = vector.shape_cast %424 : vector<8x32xf32> to vector<1x8x32xf32>
    tpu.vector_store %arg6[%c0_139, %c0_140, %c0_141], %430 {strides = array<i32>} : memref<2x8x32xf32, #tpu.memory_space<vmem>>, vector<1x8x32xf32>,
    %c0_142 = arith.constant 0 : index
    %c0_143 = arith.constant 0 : index
    %c0_144 = arith.constant 0 : index
    %431 = vector.load %arg7[%c0_142, %c0_143, %c0_144] : memref<2x8x32xf32, #tpu.memory_space<vmem>>, vector<1x8x32xf32>
    %432 = vector.shape_cast %431 : vector<1x8x32xf32> to vector<8x32xf32>
    %433 = vector.shape_cast %422 : vector<8x32xf32> to vector<1x8x32xf32>
    tpu.vector_store %arg7[%c0_142, %c0_143, %c0_144], %433 {strides = array<i32>} : memref<2x8x32xf32, #tpu.memory_space<vmem>>, vector<1x8x32xf32>,
    %c0_145 = arith.constant 0 : index
    %c0_146 = arith.constant 0 : index
    %c0_147 = arith.constant 0 : index
    %434 = vector.load %arg5[%c0_145, %c0_146, %c0_147] : memref<8x8x32xf32, #tpu.memory_space<vmem>>, vector<8x8x32xf32>
    %c1_148 = arith.constant 1 : index
    %c0_149 = arith.constant 0 : index
    %c0_150 = arith.constant 0 : index
    %435 = vector.load %arg2[%c1_148, %c0_149, %c0_150] : memref<2x32x128xf32, #tpu.memory_space<vmem>>, vector<1x32x128xf32>
    %436 = vector.shape_cast %435 : vector<1x32x128xf32> to vector<32x128xf32>
    %c1_151 = arith.constant 1 : index
    %c0_152 = arith.constant 0 : index
    %c0_153 = arith.constant 0 : index
    %437 = vector.load %arg3[%c1_151, %c0_152, %c0_153] : memref<2x32x128xf32, #tpu.memory_space<vmem>>, vector<1x32x128xf32>
    %438 = vector.shape_cast %437 : vector<1x32x128xf32> to vector<32x128xf32>
    %c1_154 = arith.constant 1 : index
    %c0_155 = arith.constant 0 : index
    %c0_156 = arith.constant 0 : index
    %439 = vector.load %arg4[%c1_154, %c0_155, %c0_156] : memref<2x1x128xf32, #tpu.memory_space<vmem>>, vector<1x1x128xf32>
    %440 = vector.shape_cast %439 : vector<1x1x128xf32> to vector<1x128xf32>
    %441 = vector.shape_cast %434 : vector<8x8x32xf32> to vector<64x32xf32>
    %cst_157 = arith.constant dense<0.000000e+00> : vector<64x128xf32>
    %442 = tpu.matmul %441, %436, %cst_157 {dimension_numbers = #tpu.dot_dimension_numbers<[1], [0], [0], [1], [0, 0, 1, 1], [], []>} : vector<64x32xf32>, vector<32x128xf32>, vector<64x128xf32> -> vector<64x128xf32>
    %443 = vector.broadcast %440 : vector<1x128xf32> to vector<64x128xf32>
    %444 = arith.addf %442, %443 : vector<64x128xf32>
    %cst_158 = arith.constant 0.000000e+00 : f32
    %445 = vector.broadcast %cst_158 : f32 to vector<8x32xf32>
    %cst_159 = arith.constant 0.000000e+00 : f32
    %446 = vector.broadcast %cst_159 : f32 to vector<8x32xf32>
    %447 = vector.extract_strided_slice %444 {offsets = [0, 0], sizes = [8, 128], strides = [1, 1]} : vector<64x128xf32> to vector<8x128xf32>
    %cst_160 = arith.constant dense<0.000000e+00> : vector<8x128xf32>
    %448 = tpu.matmul %445, %438, %cst_160 {dimension_numbers = #tpu.dot_dimension_numbers<[1], [0], [0], [1], [0, 0, 1, 1], [], []>} : vector<8x32xf32>, vector<32x128xf32>, vector<8x128xf32> -> vector<8x128xf32>
    %449 = arith.addf %447, %448 : vector<8x128xf32>
    %450 = math.tanh %449 : vector<8x128xf32>
    %451 = arith.negf %449 : vector<8x128xf32>
    %452 = math.exp %451 : vector<8x128xf32>
    %cst_161 = arith.constant 1.000000e+00 : f32
    %453 = vector.broadcast %cst_161 : f32 to vector<8x128xf32>
    %454 = arith.addf %453, %452 : vector<8x128xf32>
    %455 = arith.divf %453, %454 : vector<8x128xf32>
    %456 = arith.select %238, %450, %455 : vector<8x128xi1>, vector<8x128xf32>
    %457 = vector.extract_strided_slice %456 {offsets = [0, 0], sizes = [8, 32], strides = [1, 1]} : vector<8x128xf32> to vector<8x32xf32>
    %458 = vector.extract_strided_slice %456 {offsets = [0, 32], sizes = [8, 32], strides = [1, 1]} : vector<8x128xf32> to vector<8x32xf32>
    %459 = vector.extract_strided_slice %456 {offsets = [0, 64], sizes = [8, 32], strides = [1, 1]} : vector<8x128xf32> to vector<8x32xf32>
    %460 = vector.extract_strided_slice %456 {offsets = [0, 96], sizes = [8, 32], strides = [1, 1]} : vector<8x128xf32> to vector<8x32xf32>
    %461 = arith.mulf %458, %446 : vector<8x32xf32>
    %462 = arith.mulf %457, %459 : vector<8x32xf32>
    %463 = arith.addf %461, %462 : vector<8x32xf32>
    %464 = math.tanh %463 : vector<8x32xf32>
    %465 = arith.mulf %460, %464 : vector<8x32xf32>
    %c0_162 = arith.constant 0 : index
    %c0_163 = arith.constant 0 : index
    %c0_164 = arith.constant 0 : index
    %466 = vector.load %arg5[%c0_162, %c0_163, %c0_164] : memref<8x8x32xf32, #tpu.memory_space<vmem>>, vector<1x8x32xf32>
    %467 = vector.shape_cast %466 : vector<1x8x32xf32> to vector<8x32xf32>
    %468 = vector.shape_cast %465 : vector<8x32xf32> to vector<1x8x32xf32>
    tpu.vector_store %arg5[%c0_162, %c0_163, %c0_164], %468 {strides = array<i32>} : memref<8x8x32xf32, #tpu.memory_space<vmem>>, vector<1x8x32xf32>,
    %469 = vector.extract_strided_slice %444 {offsets = [8, 0], sizes = [8, 128], strides = [1, 1]} : vector<64x128xf32> to vector<8x128xf32>
    %cst_165 = arith.constant dense<0.000000e+00> : vector<8x128xf32>
    %470 = tpu.matmul %465, %438, %cst_165 {dimension_numbers = #tpu.dot_dimension_numbers<[1], [0], [0], [1], [0, 0, 1, 1], [], []>} : vector<8x32xf32>, vector<32x128xf32>, vector<8x128xf32> -> vector<8x128xf32>
    %471 = arith.addf %469, %470 : vector<8x128xf32>
    %472 = math.tanh %471 : vector<8x128xf32>
    %473 = arith.negf %471 : vector<8x128xf32>
    %474 = math.exp %473 : vector<8x128xf32>
    %cst_166 = arith.constant 1.000000e+00 : f32
    %475 = vector.broadcast %cst_166 : f32 to vector<8x128xf32>
    %476 = arith.addf %475, %474 : vector<8x128xf32>
    %477 = arith.divf %475, %476 : vector<8x128xf32>
    %478 = arith.select %238, %472, %477 : vector<8x128xi1>, vector<8x128xf32>
    %479 = vector.extract_strided_slice %478 {offsets = [0, 0], sizes = [8, 32], strides = [1, 1]} : vector<8x128xf32> to vector<8x32xf32>
    %480 = vector.extract_strided_slice %478 {offsets = [0, 32], sizes = [8, 32], strides = [1, 1]} : vector<8x128xf32> to vector<8x32xf32>
    %481 = vector.extract_strided_slice %478 {offsets = [0, 64], sizes = [8, 32], strides = [1, 1]} : vector<8x128xf32> to vector<8x32xf32>
    %482 = vector.extract_strided_slice %478 {offsets = [0, 96], sizes = [8, 32], strides = [1, 1]} : vector<8x128xf32> to vector<8x32xf32>
    %483 = arith.mulf %480, %463 : vector<8x32xf32>
    %484 = arith.mulf %479, %481 : vector<8x32xf32>
    %485 = arith.addf %483, %484 : vector<8x32xf32>
    %486 = math.tanh %485 : vector<8x32xf32>
    %487 = arith.mulf %482, %486 : vector<8x32xf32>
    %c1_167 = arith.constant 1 : index
    %c0_168 = arith.constant 0 : index
    %c0_169 = arith.constant 0 : index
    %488 = vector.load %arg5[%c1_167, %c0_168, %c0_169] : memref<8x8x32xf32, #tpu.memory_space<vmem>>, vector<1x8x32xf32>
    %489 = vector.shape_cast %488 : vector<1x8x32xf32> to vector<8x32xf32>
    %490 = vector.shape_cast %487 : vector<8x32xf32> to vector<1x8x32xf32>
    tpu.vector_store %arg5[%c1_167, %c0_168, %c0_169], %490 {strides = array<i32>} : memref<8x8x32xf32, #tpu.memory_space<vmem>>, vector<1x8x32xf32>,
    %491 = vector.extract_strided_slice %444 {offsets = [16, 0], sizes = [8, 128], strides = [1, 1]} : vector<64x128xf32> to vector<8x128xf32>
    %cst_170 = arith.constant dense<0.000000e+00> : vector<8x128xf32>
    %492 = tpu.matmul %487, %438, %cst_170 {dimension_numbers = #tpu.dot_dimension_numbers<[1], [0], [0], [1], [0, 0, 1, 1], [], []>} : vector<8x32xf32>, vector<32x128xf32>, vector<8x128xf32> -> vector<8x128xf32>
    %493 = arith.addf %491, %492 : vector<8x128xf32>
    %494 = math.tanh %493 : vector<8x128xf32>
    %495 = arith.negf %493 : vector<8x128xf32>
    %496 = math.exp %495 : vector<8x128xf32>
    %cst_171 = arith.constant 1.000000e+00 : f32
    %497 = vector.broadcast %cst_171 : f32 to vector<8x128xf32>
    %498 = arith.addf %497, %496 : vector<8x128xf32>
    %499 = arith.divf %497, %498 : vector<8x128xf32>
    %500 = arith.select %238, %494, %499 : vector<8x128xi1>, vector<8x128xf32>
    %501 = vector.extract_strided_slice %500 {offsets = [0, 0], sizes = [8, 32], strides = [1, 1]} : vector<8x128xf32> to vector<8x32xf32>
    %502 = vector.extract_strided_slice %500 {offsets = [0, 32], sizes = [8, 32], strides = [1, 1]} : vector<8x128xf32> to vector<8x32xf32>
    %503 = vector.extract_strided_slice %500 {offsets = [0, 64], sizes = [8, 32], strides = [1, 1]} : vector<8x128xf32> to vector<8x32xf32>
    %504 = vector.extract_strided_slice %500 {offsets = [0, 96], sizes = [8, 32], strides = [1, 1]} : vector<8x128xf32> to vector<8x32xf32>
    %505 = arith.mulf %502, %485 : vector<8x32xf32>
    %506 = arith.mulf %501, %503 : vector<8x32xf32>
    %507 = arith.addf %505, %506 : vector<8x32xf32>
    %508 = math.tanh %507 : vector<8x32xf32>
    %509 = arith.mulf %504, %508 : vector<8x32xf32>
    %c2_172 = arith.constant 2 : index
    %c0_173 = arith.constant 0 : index
    %c0_174 = arith.constant 0 : index
    %510 = vector.load %arg5[%c2_172, %c0_173, %c0_174] : memref<8x8x32xf32, #tpu.memory_space<vmem>>, vector<1x8x32xf32>
    %511 = vector.shape_cast %510 : vector<1x8x32xf32> to vector<8x32xf32>
    %512 = vector.shape_cast %509 : vector<8x32xf32> to vector<1x8x32xf32>
    tpu.vector_store %arg5[%c2_172, %c0_173, %c0_174], %512 {strides = array<i32>} : memref<8x8x32xf32, #tpu.memory_space<vmem>>, vector<1x8x32xf32>,
    %513 = vector.extract_strided_slice %444 {offsets = [24, 0], sizes = [8, 128], strides = [1, 1]} : vector<64x128xf32> to vector<8x128xf32>
    %cst_175 = arith.constant dense<0.000000e+00> : vector<8x128xf32>
    %514 = tpu.matmul %509, %438, %cst_175 {dimension_numbers = #tpu.dot_dimension_numbers<[1], [0], [0], [1], [0, 0, 1, 1], [], []>} : vector<8x32xf32>, vector<32x128xf32>, vector<8x128xf32> -> vector<8x128xf32>
    %515 = arith.addf %513, %514 : vector<8x128xf32>
    %516 = math.tanh %515 : vector<8x128xf32>
    %517 = arith.negf %515 : vector<8x128xf32>
    %518 = math.exp %517 : vector<8x128xf32>
    %cst_176 = arith.constant 1.000000e+00 : f32
    %519 = vector.broadcast %cst_176 : f32 to vector<8x128xf32>
    %520 = arith.addf %519, %518 : vector<8x128xf32>
    %521 = arith.divf %519, %520 : vector<8x128xf32>
    %522 = arith.select %238, %516, %521 : vector<8x128xi1>, vector<8x128xf32>
    %523 = vector.extract_strided_slice %522 {offsets = [0, 0], sizes = [8, 32], strides = [1, 1]} : vector<8x128xf32> to vector<8x32xf32>
    %524 = vector.extract_strided_slice %522 {offsets = [0, 32], sizes = [8, 32], strides = [1, 1]} : vector<8x128xf32> to vector<8x32xf32>
    %525 = vector.extract_strided_slice %522 {offsets = [0, 64], sizes = [8, 32], strides = [1, 1]} : vector<8x128xf32> to vector<8x32xf32>
    %526 = vector.extract_strided_slice %522 {offsets = [0, 96], sizes = [8, 32], strides = [1, 1]} : vector<8x128xf32> to vector<8x32xf32>
    %527 = arith.mulf %524, %507 : vector<8x32xf32>
    %528 = arith.mulf %523, %525 : vector<8x32xf32>
    %529 = arith.addf %527, %528 : vector<8x32xf32>
    %530 = math.tanh %529 : vector<8x32xf32>
    %531 = arith.mulf %526, %530 : vector<8x32xf32>
    %c3_177 = arith.constant 3 : index
    %c0_178 = arith.constant 0 : index
    %c0_179 = arith.constant 0 : index
    %532 = vector.load %arg5[%c3_177, %c0_178, %c0_179] : memref<8x8x32xf32, #tpu.memory_space<vmem>>, vector<1x8x32xf32>
    %533 = vector.shape_cast %532 : vector<1x8x32xf32> to vector<8x32xf32>
    %534 = vector.shape_cast %531 : vector<8x32xf32> to vector<1x8x32xf32>
    tpu.vector_store %arg5[%c3_177, %c0_178, %c0_179], %534 {strides = array<i32>} : memref<8x8x32xf32, #tpu.memory_space<vmem>>, vector<1x8x32xf32>,
    %535 = vector.extract_strided_slice %444 {offsets = [32, 0], sizes = [8, 128], strides = [1, 1]} : vector<64x128xf32> to vector<8x128xf32>
    %cst_180 = arith.constant dense<0.000000e+00> : vector<8x128xf32>
    %536 = tpu.matmul %531, %438, %cst_180 {dimension_numbers = #tpu.dot_dimension_numbers<[1], [0], [0], [1], [0, 0, 1, 1], [], []>} : vector<8x32xf32>, vector<32x128xf32>, vector<8x128xf32> -> vector<8x128xf32>
    %537 = arith.addf %535, %536 : vector<8x128xf32>
    %538 = math.tanh %537 : vector<8x128xf32>
    %539 = arith.negf %537 : vector<8x128xf32>
    %540 = math.exp %539 : vector<8x128xf32>
    %cst_181 = arith.constant 1.000000e+00 : f32
    %541 = vector.broadcast %cst_181 : f32 to vector<8x128xf32>
    %542 = arith.addf %541, %540 : vector<8x128xf32>
    %543 = arith.divf %541, %542 : vector<8x128xf32>
    %544 = arith.select %238, %538, %543 : vector<8x128xi1>, vector<8x128xf32>
    %545 = vector.extract_strided_slice %544 {offsets = [0, 0], sizes = [8, 32], strides = [1, 1]} : vector<8x128xf32> to vector<8x32xf32>
    %546 = vector.extract_strided_slice %544 {offsets = [0, 32], sizes = [8, 32], strides = [1, 1]} : vector<8x128xf32> to vector<8x32xf32>
    %547 = vector.extract_strided_slice %544 {offsets = [0, 64], sizes = [8, 32], strides = [1, 1]} : vector<8x128xf32> to vector<8x32xf32>
    %548 = vector.extract_strided_slice %544 {offsets = [0, 96], sizes = [8, 32], strides = [1, 1]} : vector<8x128xf32> to vector<8x32xf32>
    %549 = arith.mulf %546, %529 : vector<8x32xf32>
    %550 = arith.mulf %545, %547 : vector<8x32xf32>
    %551 = arith.addf %549, %550 : vector<8x32xf32>
    %552 = math.tanh %551 : vector<8x32xf32>
    %553 = arith.mulf %548, %552 : vector<8x32xf32>
    %c4_182 = arith.constant 4 : index
    %c0_183 = arith.constant 0 : index
    %c0_184 = arith.constant 0 : index
    %554 = vector.load %arg5[%c4_182, %c0_183, %c0_184] : memref<8x8x32xf32, #tpu.memory_space<vmem>>, vector<1x8x32xf32>
    %555 = vector.shape_cast %554 : vector<1x8x32xf32> to vector<8x32xf32>
    %556 = vector.shape_cast %553 : vector<8x32xf32> to vector<1x8x32xf32>
    tpu.vector_store %arg5[%c4_182, %c0_183, %c0_184], %556 {strides = array<i32>} : memref<8x8x32xf32, #tpu.memory_space<vmem>>, vector<1x8x32xf32>,
    %557 = vector.extract_strided_slice %444 {offsets = [40, 0], sizes = [8, 128], strides = [1, 1]} : vector<64x128xf32> to vector<8x128xf32>
    %cst_185 = arith.constant dense<0.000000e+00> : vector<8x128xf32>
    %558 = tpu.matmul %553, %438, %cst_185 {dimension_numbers = #tpu.dot_dimension_numbers<[1], [0], [0], [1], [0, 0, 1, 1], [], []>} : vector<8x32xf32>, vector<32x128xf32>, vector<8x128xf32> -> vector<8x128xf32>
    %559 = arith.addf %557, %558 : vector<8x128xf32>
    %560 = math.tanh %559 : vector<8x128xf32>
    %561 = arith.negf %559 : vector<8x128xf32>
    %562 = math.exp %561 : vector<8x128xf32>
    %cst_186 = arith.constant 1.000000e+00 : f32
    %563 = vector.broadcast %cst_186 : f32 to vector<8x128xf32>
    %564 = arith.addf %563, %562 : vector<8x128xf32>
    %565 = arith.divf %563, %564 : vector<8x128xf32>
    %566 = arith.select %238, %560, %565 : vector<8x128xi1>, vector<8x128xf32>
    %567 = vector.extract_strided_slice %566 {offsets = [0, 0], sizes = [8, 32], strides = [1, 1]} : vector<8x128xf32> to vector<8x32xf32>
    %568 = vector.extract_strided_slice %566 {offsets = [0, 32], sizes = [8, 32], strides = [1, 1]} : vector<8x128xf32> to vector<8x32xf32>
    %569 = vector.extract_strided_slice %566 {offsets = [0, 64], sizes = [8, 32], strides = [1, 1]} : vector<8x128xf32> to vector<8x32xf32>
    %570 = vector.extract_strided_slice %566 {offsets = [0, 96], sizes = [8, 32], strides = [1, 1]} : vector<8x128xf32> to vector<8x32xf32>
    %571 = arith.mulf %568, %551 : vector<8x32xf32>
    %572 = arith.mulf %567, %569 : vector<8x32xf32>
    %573 = arith.addf %571, %572 : vector<8x32xf32>
    %574 = math.tanh %573 : vector<8x32xf32>
    %575 = arith.mulf %570, %574 : vector<8x32xf32>
    %c5_187 = arith.constant 5 : index
    %c0_188 = arith.constant 0 : index
    %c0_189 = arith.constant 0 : index
    %576 = vector.load %arg5[%c5_187, %c0_188, %c0_189] : memref<8x8x32xf32, #tpu.memory_space<vmem>>, vector<1x8x32xf32>
    %577 = vector.shape_cast %576 : vector<1x8x32xf32> to vector<8x32xf32>
    %578 = vector.shape_cast %575 : vector<8x32xf32> to vector<1x8x32xf32>
    tpu.vector_store %arg5[%c5_187, %c0_188, %c0_189], %578 {strides = array<i32>} : memref<8x8x32xf32, #tpu.memory_space<vmem>>, vector<1x8x32xf32>,
    %579 = vector.extract_strided_slice %444 {offsets = [48, 0], sizes = [8, 128], strides = [1, 1]} : vector<64x128xf32> to vector<8x128xf32>
    %cst_190 = arith.constant dense<0.000000e+00> : vector<8x128xf32>
    %580 = tpu.matmul %575, %438, %cst_190 {dimension_numbers = #tpu.dot_dimension_numbers<[1], [0], [0], [1], [0, 0, 1, 1], [], []>} : vector<8x32xf32>, vector<32x128xf32>, vector<8x128xf32> -> vector<8x128xf32>
    %581 = arith.addf %579, %580 : vector<8x128xf32>
    %582 = math.tanh %581 : vector<8x128xf32>
    %583 = arith.negf %581 : vector<8x128xf32>
    %584 = math.exp %583 : vector<8x128xf32>
    %cst_191 = arith.constant 1.000000e+00 : f32
    %585 = vector.broadcast %cst_191 : f32 to vector<8x128xf32>
    %586 = arith.addf %585, %584 : vector<8x128xf32>
    %587 = arith.divf %585, %586 : vector<8x128xf32>
    %588 = arith.select %238, %582, %587 : vector<8x128xi1>, vector<8x128xf32>
    %589 = vector.extract_strided_slice %588 {offsets = [0, 0], sizes = [8, 32], strides = [1, 1]} : vector<8x128xf32> to vector<8x32xf32>
    %590 = vector.extract_strided_slice %588 {offsets = [0, 32], sizes = [8, 32], strides = [1, 1]} : vector<8x128xf32> to vector<8x32xf32>
    %591 = vector.extract_strided_slice %588 {offsets = [0, 64], sizes = [8, 32], strides = [1, 1]} : vector<8x128xf32> to vector<8x32xf32>
    %592 = vector.extract_strided_slice %588 {offsets = [0, 96], sizes = [8, 32], strides = [1, 1]} : vector<8x128xf32> to vector<8x32xf32>
    %593 = arith.mulf %590, %573 : vector<8x32xf32>
    %594 = arith.mulf %589, %591 : vector<8x32xf32>
    %595 = arith.addf %593, %594 : vector<8x32xf32>
    %596 = math.tanh %595 : vector<8x32xf32>
    %597 = arith.mulf %592, %596 : vector<8x32xf32>
    %c6_192 = arith.constant 6 : index
    %c0_193 = arith.constant 0 : index
    %c0_194 = arith.constant 0 : index
    %598 = vector.load %arg5[%c6_192, %c0_193, %c0_194] : memref<8x8x32xf32, #tpu.memory_space<vmem>>, vector<1x8x32xf32>
    %599 = vector.shape_cast %598 : vector<1x8x32xf32> to vector<8x32xf32>
    %600 = vector.shape_cast %597 : vector<8x32xf32> to vector<1x8x32xf32>
    tpu.vector_store %arg5[%c6_192, %c0_193, %c0_194], %600 {strides = array<i32>} : memref<8x8x32xf32, #tpu.memory_space<vmem>>, vector<1x8x32xf32>,
    %601 = vector.extract_strided_slice %444 {offsets = [56, 0], sizes = [8, 128], strides = [1, 1]} : vector<64x128xf32> to vector<8x128xf32>
    %cst_195 = arith.constant dense<0.000000e+00> : vector<8x128xf32>
    %602 = tpu.matmul %597, %438, %cst_195 {dimension_numbers = #tpu.dot_dimension_numbers<[1], [0], [0], [1], [0, 0, 1, 1], [], []>} : vector<8x32xf32>, vector<32x128xf32>, vector<8x128xf32> -> vector<8x128xf32>
    %603 = arith.addf %601, %602 : vector<8x128xf32>
    %604 = math.tanh %603 : vector<8x128xf32>
    %605 = arith.negf %603 : vector<8x128xf32>
    %606 = math.exp %605 : vector<8x128xf32>
    %cst_196 = arith.constant 1.000000e+00 : f32
    %607 = vector.broadcast %cst_196 : f32 to vector<8x128xf32>
    %608 = arith.addf %607, %606 : vector<8x128xf32>
    %609 = arith.divf %607, %608 : vector<8x128xf32>
    %610 = arith.select %238, %604, %609 : vector<8x128xi1>, vector<8x128xf32>
    %611 = vector.extract_strided_slice %610 {offsets = [0, 0], sizes = [8, 32], strides = [1, 1]} : vector<8x128xf32> to vector<8x32xf32>
    %612 = vector.extract_strided_slice %610 {offsets = [0, 32], sizes = [8, 32], strides = [1, 1]} : vector<8x128xf32> to vector<8x32xf32>
    %613 = vector.extract_strided_slice %610 {offsets = [0, 64], sizes = [8, 32], strides = [1, 1]} : vector<8x128xf32> to vector<8x32xf32>
    %614 = vector.extract_strided_slice %610 {offsets = [0, 96], sizes = [8, 32], strides = [1, 1]} : vector<8x128xf32> to vector<8x32xf32>
    %615 = arith.mulf %612, %595 : vector<8x32xf32>
    %616 = arith.mulf %611, %613 : vector<8x32xf32>
    %617 = arith.addf %615, %616 : vector<8x32xf32>
    %618 = math.tanh %617 : vector<8x32xf32>
    %619 = arith.mulf %614, %618 : vector<8x32xf32>
    %c7_197 = arith.constant 7 : index
    %c0_198 = arith.constant 0 : index
    %c0_199 = arith.constant 0 : index
    %620 = vector.load %arg5[%c7_197, %c0_198, %c0_199] : memref<8x8x32xf32, #tpu.memory_space<vmem>>, vector<1x8x32xf32>
    %621 = vector.shape_cast %620 : vector<1x8x32xf32> to vector<8x32xf32>
    %622 = vector.shape_cast %619 : vector<8x32xf32> to vector<1x8x32xf32>
    tpu.vector_store %arg5[%c7_197, %c0_198, %c0_199], %622 {strides = array<i32>} : memref<8x8x32xf32, #tpu.memory_space<vmem>>, vector<1x8x32xf32>,
    %c1_200 = arith.constant 1 : index
    %c0_201 = arith.constant 0 : index
    %c0_202 = arith.constant 0 : index
    %623 = vector.load %arg6[%c1_200, %c0_201, %c0_202] : memref<2x8x32xf32, #tpu.memory_space<vmem>>, vector<1x8x32xf32>
    %624 = vector.shape_cast %623 : vector<1x8x32xf32> to vector<8x32xf32>
    %625 = vector.shape_cast %619 : vector<8x32xf32> to vector<1x8x32xf32>
    tpu.vector_store %arg6[%c1_200, %c0_201, %c0_202], %625 {strides = array<i32>} : memref<2x8x32xf32, #tpu.memory_space<vmem>>, vector<1x8x32xf32>,
    %c1_203 = arith.constant 1 : index
    %c0_204 = arith.constant 0 : index
    %c0_205 = arith.constant 0 : index
    %626 = vector.load %arg7[%c1_203, %c0_204, %c0_205] : memref<2x8x32xf32, #tpu.memory_space<vmem>>, vector<1x8x32xf32>
    %627 = vector.shape_cast %626 : vector<1x8x32xf32> to vector<8x32xf32>
    %628 = vector.shape_cast %617 : vector<8x32xf32> to vector<1x8x32xf32>
    tpu.vector_store %arg7[%c1_203, %c0_204, %c0_205], %628 {strides = array<i32>} : memref<2x8x32xf32, #tpu.memory_space<vmem>>, vector<1x8x32xf32>,
    return
  }
}

</mosaic_0001>

<llo_original>
// kernel: forward_pallas.1
$region0: #{forward_pallas.1}
  #allocation0 [shape = 'u32[]', space=smem, size = 0x4, offset = 0x4, fixed_abs, tag = 'smem constant byte address 0x4 - core index']
  #allocation1 [shape = 'u32[72,128]{1,0:T(1,128)}', space=vmem, size = 0x9000, scoped, tag = 'internal scratch']
  #allocation2 [shape = 'f32[8,8,32]{2,1,0:T(8,128)}', space=vmem, size = 0x8000, scoped, tag = 'scratch operand']
  %s0 = inlined_call_operand.vmem [shape: f32[8,8,128], index: 0, kind: input, shape index: {}]
  %s1 = inlined_call_operand.vmem [shape: f32[32,128], index: 1, kind: input, shape index: {}]
  %s2 = inlined_call_operand.vmem [shape: f32[2,32,128], index: 2, kind: input, shape index: {}]
  %s3 = inlined_call_operand.vmem [shape: f32[2,32,128], index: 3, kind: input, shape index: {}]
  %s4 = inlined_call_operand.vmem [shape: f32[2,1,128], index: 4, kind: input, shape index: {}]
  %s5 = inlined_call_operand.vmem [shape: f32[8,8,32], index: 5, kind: output, shape index: {0}]
  %s6 = inlined_call_operand.vmem [shape: f32[2,8,32], index: 6, kind: output, shape index: {1}]
  %s7 = inlined_call_operand.vmem [shape: f32[2,8,32], index: 7, kind: output, shape index: {2}]
  %8 = xla_tuple %s5, %s6, %s7
  %s9 = sld [smem:[#allocation0]]
  $region46: #{forward_pallas.1} parent=0
    _
  %s11 = ssub.s32 1, %s9
  %s12 = scalar_select 0, %s11, %s9
  // Predicated region
  $region2: #{forward_pallas.1} parent=0 // pred_check
    _
  $region3: #{forward_pallas.1} parent=0 // pred_check_branch
    %14 = sbr.rel (0) target = $region5
  $region4: #{forward_pallas.1} parent=0 // pred_region
    _
  $region5: #{forward_pallas.1} parent=0 // pred_fallthru
    _
  // Predicated region
  $region6: #{forward_pallas.1} parent=0 // pred_check
    _
  $region7: #{forward_pallas.1} parent=0 // pred_check_branch
    %16 = sbr.rel (0) target = $region9
  $region8: #{forward_pallas.1} parent=0 // pred_region
    _
  $region9: #{forward_pallas.1} parent=0 // pred_fallthru
    _
  // Predicated region
  $region10: #{forward_pallas.1} parent=0 // pred_check
    _
  $region11: #{forward_pallas.1} parent=0 // pred_check_branch
    %18 = sbr.rel (0) target = $region13
  $region12: #{forward_pallas.1} parent=0 // pred_region
    _
  $region13: #{forward_pallas.1} parent=0 // pred_fallthru
    _
  // Predicated region
  $region14: #{forward_pallas.1} parent=0 // pred_check
    _
  $region15: #{forward_pallas.1} parent=0 // pred_check_branch
    %20 = sbr.rel (0) target = $region17
  $region16: #{forward_pallas.1} parent=0 // pred_region
    _
  $region17: #{forward_pallas.1} parent=0 // pred_fallthru
    _
  // Predicated region
  $region18: #{forward_pallas.1} parent=0 // pred_check
    _
  $region19: #{forward_pallas.1} parent=0 // pred_check_branch
    %22 = sbr.rel (0) target = $region21
  $region20: #{forward_pallas.1} parent=0 // pred_region
    _
  $region21: #{forward_pallas.1} parent=0 // pred_fallthru
    _
  %v23 = vld [vmem:[%s1] sm:$0xff]
  %v24 = vld [vmem:[%s1 + $0x8] sm:$0xff]
  %v25 = vld [vmem:[%s1 + $0x10] sm:$0xff]
  %v26 = vld [vmem:[%s1 + $0x18] sm:$0xff]
  %v27 = vlaneseq
  %v28 = vand.u32 %v27, 127
  %vm29 = vcmp.ge.s32.totalorder %v28, 64
  %vm30 = vcmp.lt.s32.totalorder %v28, 96
  %vm31 = vmand %vm29, %vm30
  %v32 = vld [vmem:[%s0] sm:$0xff]
  %vm33 = vcmask 261120
  %v35 = vsel %vm33, 0.0, 0
  %37 = vmatpush.msra.mxu0 0.0
  %38 = vmatpush.msra.mxu0 0.0
  %39 = vmatpush.msra.mxu0 0.0
  %40 = vmatpush.msra.mxu0 0.0
  %41 = vmatpush.msra.mxu0 0.0
  %42 = vmatpush.msra.mxu0 0.0
  %43 = vmatpush.msra.mxu0 0.0
  %44 = vmatpush.msra.mxu0 0.0
  %45 = vmatpush.msra.mxu0 0.0
  %46 = vmatpush.msra.mxu0 0.0
  %47 = vmatpush.msra.mxu0 0.0
  %48 = vmatpush.msra.mxu0 0.0
  %49 = vmatpush.msra.mxu0 %v26
  %50 = vmatpush.msra.mxu0 %v25
  %51 = vmatpush.msra.mxu0 %v24
  %52 = vmatpush.msra.mxu0 %v23
  %53 = vmatmul.f32.gmra.mxu0 %v35
  %v54 = vpop.f32.mrf.mxu0
  %v55 = vadd.f32 0.0, %v54
  %56 = vdwg.mxu0
  %v57 = vadd.f32 %v32, %v55
  %v58 = vtanh.pop %v57
  %v59 = vxor.u32 %v57, 2147483648
  %v60 = vmul.f32 %v59, 1.442695
  %v61 = vpow.pop %v60
  %v62 = vadd.f32 %v61, 1.0
  %v63 = vrcp.pop %v62
  %v64 = vmul.f32 %v62, %v63
  %v65 = vsub.f32 1.0, %v64
  %v66 = vmul.f32 %v63, %v65
  %v67 = vadd.f32 %v63, %v66
  %vm68 = vweird.f32 %v62
  %vm69 = vweird.f32 %v63
  %vm70 = vmor %vm68, %vm69
  %v71 = vsel %vm70, %v63, %v67
  %v72 = vand.u32 2147483647, %v62
  %vm73 = vcmp.eq.f32.partialorder %v72, 8.507059e+37
  %v74 = vand.u32 %v62, 2147483648
  %v75 = vor.u32 1.1754944e-38, %v74
  %v76 = vsel %vm73, %v75, %v71
  %v77 = vmul.f32 1.0, %v76
  %v78 = vsel %vm31, %v58, %v77
  %v79 = vmul.f32 %v78, 0.0
  %81 = vrot.lane.b32.xlu0 %v78, 64
  %v82 = vpop.permute.xlu0 %81
  %v84 = vmul.f32 %v78, %v82
  %86 = vrot.lane.b32.xlu0 %v84, 32
  %v87 = vpop.permute.xlu0 %86
  %v89 = vadd.f32 %v79, %v87
  %v90 = vtanh.pop %v89
  %92 = vrot.lane.b32.xlu0 %v90, 64
  %v93 = vpop.permute.xlu0 %92
  %v95 = vmul.f32 %v78, %v93
  %97 = vrot.lane.b32.xlu0 %v95, 32
  %v98 = vpop.permute.xlu0 %97
  %vm100 = vcmask 130048
  %101 = vst.msk [vmem:[#allocation2] sm:$0xff] %vm100, %v98
  %s102 = scalar_lea.vmem [#allocation2], 56
  %vm103 = vcmask 261248
  %104 = vst.msk [vmem:[%s102] sm:$0xff] %vm103, %v98
  %s105 = scalar_lea.vmem %s0, 8
  %v106 = vld [vmem:[%s105] sm:$0xff]
  %v107 = vsel %vm33, %v98, 0
  %109 = vmatpush.msra.mxu0 0.0
  %110 = vmatpush.msra.mxu0 0.0
  %111 = vmatpush.msra.mxu0 0.0
  %112 = vmatpush.msra.mxu0 0.0
  %113 = vmatpush.msra.mxu0 0.0
  %114 = vmatpush.msra.mxu0 0.0
  %115 = vmatpush.msra.mxu0 0.0
  %116 = vmatpush.msra.mxu0 0.0
  %117 = vmatpush.msra.mxu0 0.0
  %118 = vmatpush.msra.mxu0 0.0
  %119 = vmatpush.msra.mxu0 0.0
  %120 = vmatpush.msra.mxu0 0.0
  %121 = vmatpush.msra.mxu0 %v26
  %122 = vmatpush.msra.mxu0 %v25
  %123 = vmatpush.msra.mxu0 %v24
  %124 = vmatpush.msra.mxu0 %v23
  %125 = vmatmul.f32.gmra.mxu0 %v107
  %v126 = vpop.f32.mrf.mxu0
  %v127 = vadd.f32 0.0, %v126
  %128 = vdwg.mxu0
  %v129 = vadd.f32 %v106, %v127
  %v130 = vtanh.pop %v129
  %v131 = vxor.u32 %v129, 2147483648
  %v132 = vmul.f32 %v131, 1.442695
  %v133 = vpow.pop %v132
  %v134 = vadd.f32 %v133, 1.0
  %v135 = vrcp.pop %v134
  %v136 = vmul.f32 %v134, %v135
  %v137 = vsub.f32 1.0, %v136
  %v138 = vmul.f32 %v135, %v137
  %v139 = vadd.f32 %v135, %v138
  %vm140 = vweird.f32 %v134
  %vm141 = vweird.f32 %v135
  %vm142 = vmor %vm140, %vm141
  %v143 = vsel %vm142, %v135, %v139
  %v144 = vand.u32 2147483647, %v134
  %vm145 = vcmp.eq.f32.partialorder %v144, 8.507059e+37
  %v146 = vand.u32 %v134, 2147483648
  %v147 = vor.u32 1.1754944e-38, %v146
  %v148 = vsel %vm145, %v147, %v143
  %v149 = vmul.f32 1.0, %v148
  %v150 = vsel %vm31, %v130, %v149
  %v151 = vmul.f32 %v150, %v89
  %153 = vrot.lane.b32.xlu0 %v150, 64
  %v154 = vpop.permute.xlu0 %153
  %v156 = vmul.f32 %v150, %v154
  %158 = vrot.lane.b32.xlu0 %v156, 32
  %v159 = vpop.permute.xlu0 %158
  %v161 = vadd.f32 %v151, %v159
  %v162 = vtanh.pop %v161
  %164 = vrot.lane.b32.xlu0 %v162, 64
  %v165 = vpop.permute.xlu0 %164
  %v167 = vmul.f32 %v150, %v165
  %169 = vrot.lane.b32.xlu0 %v167, 32
  %v170 = vpop.permute.xlu0 %169
  %s172 = scalar_lea.vmem [#allocation2], 8
  %173 = vst.msk [vmem:[%s172] sm:$0xff] %vm100, %v170
  %s174 = scalar_lea.vmem [#allocation2], 48
  %175 = vst.msk [vmem:[%s174] sm:$0xff] %vm103, %v170
  %s176 = scalar_lea.vmem %s0, 16
  %v177 = vld [vmem:[%s176] sm:$0xff]
  %v178 = vsel %vm33, %v170, 0
  %180 = vmatpush.msra.mxu0 0.0
  %181 = vmatpush.msra.mxu0 0.0
  %182 = vmatpush.msra.mxu0 0.0
  %183 = vmatpush.msra.mxu0 0.0
  %184 = vmatpush.msra.mxu0 0.0
  %185 = vmatpush.msra.mxu0 0.0
  %186 = vmatpush.msra.mxu0 0.0
  %187 = vmatpush.msra.mxu0 0.0
  %188 = vmatpush.msra.mxu0 0.0
  %189 = vmatpush.msra.mxu0 0.0
  %190 = vmatpush.msra.mxu0 0.0
  %191 = vmatpush.msra.mxu0 0.0
  %192 = vmatpush.msra.mxu0 %v26
  %193 = vmatpush.msra.mxu0 %v25
  %194 = vmatpush.msra.mxu0 %v24
  %195 = vmatpush.msra.mxu0 %v23
  %196 = vmatmul.f32.gmra.mxu0 %v178
  %v197 = vpop.f32.mrf.mxu0
  %v198 = vadd.f32 0.0, %v197
  %199 = vdwg.mxu0
  %v200 = vadd.f32 %v177, %v198
  %v201 = vtanh.pop %v200
  %v202 = vxor.u32 %v200, 2147483648
  %v203 = vmul.f32 %v202, 1.442695
  %v204 = vpow.pop %v203
  %v205 = vadd.f32 %v204, 1.0
  %v206 = vrcp.pop %v205
  %v207 = vmul.f32 %v205, %v206
  %v208 = vsub.f32 1.0, %v207
  %v209 = vmul.f32 %v206, %v208
  %v210 = vadd.f32 %v206, %v209
  %vm211 = vweird.f32 %v205
  %vm212 = vweird.f32 %v206
  %vm213 = vmor %vm211, %vm212
  %v214 = vsel %vm213, %v206, %v210
  %v215 = vand.u32 2147483647, %v205
  %vm216 = vcmp.eq.f32.partialorder %v215, 8.507059e+37
  %v217 = vand.u32 %v205, 2147483648
  %v218 = vor.u32 1.1754944e-38, %v217
  %v219 = vsel %vm216, %v218, %v214
  %v220 = vmul.f32 1.0, %v219
  %v221 = vsel %vm31, %v201, %v220
  %v222 = vmul.f32 %v221, %v161
  %224 = vrot.lane.b32.xlu0 %v221, 64
  %v225 = vpop.permute.xlu0 %224
  %v227 = vmul.f32 %v221, %v225
  %229 = vrot.lane.b32.xlu0 %v227, 32
  %v230 = vpop.permute.xlu0 %229
  %v232 = vadd.f32 %v222, %v230
  %v233 = vtanh.pop %v232
  %235 = vrot.lane.b32.xlu0 %v233, 64
  %v236 = vpop.permute.xlu0 %235
  %v238 = vmul.f32 %v221, %v236
  %240 = vrot.lane.b32.xlu0 %v238, 32
  %v241 = vpop.permute.xlu0 %240
  %s243 = scalar_lea.vmem [#allocation2], 16
  %244 = vst.msk [vmem:[%s243] sm:$0xff] %vm100, %v241
  %s245 = scalar_lea.vmem [#allocation2], 40
  %246 = vst.msk [vmem:[%s245] sm:$0xff] %vm103, %v241
  %s247 = scalar_lea.vmem %s0, 24
  %v248 = vld [vmem:[%s247] sm:$0xff]
  %v249 = vsel %vm33, %v241, 0
  %251 = vmatpush.msra.mxu0 0.0
  %252 = vmatpush.msra.mxu0 0.0
  %253 = vmatpush.msra.mxu0 0.0
  %254 = vmatpush.msra.mxu0 0.0
  %255 = vmatpush.msra.mxu0 0.0
  %256 = vmatpush.msra.mxu0 0.0
  %257 = vmatpush.msra.mxu0 0.0
  %258 = vmatpush.msra.mxu0 0.0
  %259 = vmatpush.msra.mxu0 0.0
  %260 = vmatpush.msra.mxu0 0.0
  %261 = vmatpush.msra.mxu0 0.0
  %262 = vmatpush.msra.mxu0 0.0
  %263 = vmatpush.msra.mxu0 %v26
  %264 = vmatpush.msra.mxu0 %v25
  %265 = vmatpush.msra.mxu0 %v24
  %266 = vmatpush.msra.mxu0 %v23
  %267 = vmatmul.f32.gmra.mxu0 %v249
  %v268 = vpop.f32.mrf.mxu0
  %v269 = vadd.f32 0.0, %v268
  %270 = vdwg.mxu0
  %v271 = vadd.f32 %v248, %v269
  %v272 = vtanh.pop %v271
  %v273 = vxor.u32 %v271, 2147483648
  %v274 = vmul.f32 %v273, 1.442695
  %v275 = vpow.pop %v274
  %v276 = vadd.f32 %v275, 1.0
  %v277 = vrcp.pop %v276
  %v278 = vmul.f32 %v276, %v277
  %v279 = vsub.f32 1.0, %v278
  %v280 = vmul.f32 %v277, %v279
  %v281 = vadd.f32 %v277, %v280
  %vm282 = vweird.f32 %v276
  %vm283 = vweird.f32 %v277
  %vm284 = vmor %vm282, %vm283
  %v285 = vsel %vm284, %v277, %v281
  %v286 = vand.u32 2147483647, %v276
  %vm287 = vcmp.eq.f32.partialorder %v286, 8.507059e+37
  %v288 = vand.u32 %v276, 2147483648
  %v289 = vor.u32 1.1754944e-38, %v288
  %v290 = vsel %vm287, %v289, %v285
  %v291 = vmul.f32 1.0, %v290
  %v292 = vsel %vm31, %v272, %v291
  %v293 = vmul.f32 %v292, %v232
  %295 = vrot.lane.b32.xlu0 %v292, 64
  %v296 = vpop.permute.xlu0 %295
  %v298 = vmul.f32 %v292, %v296
  %300 = vrot.lane.b32.xlu0 %v298, 32
  %v301 = vpop.permute.xlu0 %300
  %v303 = vadd.f32 %v293, %v301
  %v304 = vtanh.pop %v303
  %306 = vrot.lane.b32.xlu0 %v304, 64
  %v307 = vpop.permute.xlu0 %306
  %v309 = vmul.f32 %v292, %v307
  %311 = vrot.lane.b32.xlu0 %v309, 32
  %v312 = vpop.permute.xlu0 %311
  %s314 = scalar_lea.vmem [#allocation2], 24
  %315 = vst.msk [vmem:[%s314] sm:$0xff] %vm100, %v312
  %s316 = scalar_lea.vmem [#allocation2], 32
  %317 = vst.msk [vmem:[%s316] sm:$0xff] %vm103, %v312
  %s318 = scalar_lea.vmem %s0, 32
  %v319 = vld [vmem:[%s318] sm:$0xff]
  %v320 = vsel %vm33, %v312, 0
  %322 = vmatpush.msra.mxu0 0.0
  %323 = vmatpush.msra.mxu0 0.0
  %324 = vmatpush.msra.mxu0 0.0
  %325 = vmatpush.msra.mxu0 0.0
  %326 = vmatpush.msra.mxu0 0.0
  %327 = vmatpush.msra.mxu0 0.0
  %328 = vmatpush.msra.mxu0 0.0
  %329 = vmatpush.msra.mxu0 0.0
  %330 = vmatpush.msra.mxu0 0.0
  %331 = vmatpush.msra.mxu0 0.0
  %332 = vmatpush.msra.mxu0 0.0
  %333 = vmatpush.msra.mxu0 0.0
  %334 = vmatpush.msra.mxu0 %v26
  %335 = vmatpush.msra.mxu0 %v25
  %336 = vmatpush.msra.mxu0 %v24
  %337 = vmatpush.msra.mxu0 %v23
  %338 = vmatmul.f32.gmra.mxu0 %v320
  %v339 = vpop.f32.mrf.mxu0
  %v340 = vadd.f32 0.0, %v339
  %341 = vdwg.mxu0
  %v342 = vadd.f32 %v319, %v340
  %v343 = vtanh.pop %v342
  %v344 = vxor.u32 %v342, 2147483648
  %v345 = vmul.f32 %v344, 1.442695
  %v346 = vpow.pop %v345
  %v347 = vadd.f32 %v346, 1.0
  %v348 = vrcp.pop %v347
  %v349 = vmul.f32 %v347, %v348
  %v350 = vsub.f32 1.0, %v349
  %v351 = vmul.f32 %v348, %v350
  %v352 = vadd.f32 %v348, %v351
  %vm353 = vweird.f32 %v347
  %vm354 = vweird.f32 %v348
  %vm355 = vmor %vm353, %vm354
  %v356 = vsel %vm355, %v348, %v352
  %v357 = vand.u32 2147483647, %v347
  %vm358 = vcmp.eq.f32.partialorder %v357, 8.507059e+37
  %v359 = vand.u32 %v347, 2147483648
  %v360 = vor.u32 1.1754944e-38, %v359
  %v361 = vsel %vm358, %v360, %v356
  %v362 = vmul.f32 1.0, %v361
  %v363 = vsel %vm31, %v343, %v362
  %v364 = vmul.f32 %v363, %v303
  %366 = vrot.lane.b32.xlu0 %v363, 64
  %v367 = vpop.permute.xlu0 %366
  %v369 = vmul.f32 %v363, %v367
  %371 = vrot.lane.b32.xlu0 %v369, 32
  %v372 = vpop.permute.xlu0 %371
  %v374 = vadd.f32 %v364, %v372
  %v375 = vtanh.pop %v374
  %377 = vrot.lane.b32.xlu0 %v375, 64
  %v378 = vpop.permute.xlu0 %377
  %v380 = vmul.f32 %v363, %v378
  %382 = vrot.lane.b32.xlu0 %v380, 32
  %v383 = vpop.permute.xlu0 %382
  %385 = vst.msk [vmem:[%s316] sm:$0xff] %vm100, %v383
  %386 = vst.msk [vmem:[%s314] sm:$0xff] %vm103, %v383
  %s387 = scalar_lea.vmem %s0, 40
  %v388 = vld [vmem:[%s387] sm:$0xff]
  %v389 = vsel %vm33, %v383, 0
  %391 = vmatpush.msra.mxu0 0.0
  %392 = vmatpush.msra.mxu0 0.0
  %393 = vmatpush.msra.mxu0 0.0
  %394 = vmatpush.msra.mxu0 0.0
  %395 = vmatpush.msra.mxu0 0.0
  %396 = vmatpush.msra.mxu0 0.0
  %397 = vmatpush.msra.mxu0 0.0
  %398 = vmatpush.msra.mxu0 0.0
  %399 = vmatpush.msra.mxu0 0.0
  %400 = vmatpush.msra.mxu0 0.0
  %401 = vmatpush.msra.mxu0 0.0
  %402 = vmatpush.msra.mxu0 0.0
  %403 = vmatpush.msra.mxu0 %v26
  %404 = vmatpush.msra.mxu0 %v25
  %405 = vmatpush.msra.mxu0 %v24
  %406 = vmatpush.msra.mxu0 %v23
  %407 = vmatmul.f32.gmra.mxu0 %v389
  %v408 = vpop.f32.mrf.mxu0
  %v409 = vadd.f32 0.0, %v408
  %410 = vdwg.mxu0
  %v411 = vadd.f32 %v388, %v409
  %v412 = vtanh.pop %v411
  %v413 = vxor.u32 %v411, 2147483648
  %v414 = vmul.f32 %v413, 1.442695
  %v415 = vpow.pop %v414
  %v416 = vadd.f32 %v415, 1.0
  %v417 = vrcp.pop %v416
  %v418 = vmul.f32 %v416, %v417
  %v419 = vsub.f32 1.0, %v418
  %v420 = vmul.f32 %v417, %v419
  %v421 = vadd.f32 %v417, %v420
  %vm422 = vweird.f32 %v416
  %vm423 = vweird.f32 %v417
  %vm424 = vmor %vm422, %vm423
  %v425 = vsel %vm424, %v417, %v421
  %v426 = vand.u32 2147483647, %v416
  %vm427 = vcmp.eq.f32.partialorder %v426, 8.507059e+37
  %v428 = vand.u32 %v416, 2147483648
  %v429 = vor.u32 1.1754944e-38, %v428
  %v430 = vsel %vm427, %v429, %v425
  %v431 = vmul.f32 1.0, %v430
  %v432 = vsel %vm31, %v412, %v431
  %v433 = vmul.f32 %v432, %v374
  %435 = vrot.lane.b32.xlu0 %v432, 64
  %v436 = vpop.permute.xlu0 %435
  %v438 = vmul.f32 %v432, %v436
  %440 = vrot.lane.b32.xlu0 %v438, 32
  %v441 = vpop.permute.xlu0 %440
  %v443 = vadd.f32 %v433, %v441
  %v444 = vtanh.pop %v443
  %446 = vrot.lane.b32.xlu0 %v444, 64
  %v447 = vpop.permute.xlu0 %446
  %v449 = vmul.f32 %v432, %v447
  %451 = vrot.lane.b32.xlu0 %v449, 32
  %v452 = vpop.permute.xlu0 %451
  %454 = vst.msk [vmem:[%s245] sm:$0xff] %vm100, %v452
  %455 = vst.msk [vmem:[%s243] sm:$0xff] %vm103, %v452
  %s456 = scalar_lea.vmem %s0, 48
  %v457 = vld [vmem:[%s456] sm:$0xff]
  %v458 = vsel %vm33, %v452, 0
  %460 = vmatpush.msra.mxu0 0.0
  %461 = vmatpush.msra.mxu0 0.0
  %462 = vmatpush.msra.mxu0 0.0
  %463 = vmatpush.msra.mxu0 0.0
  %464 = vmatpush.msra.mxu0 0.0
  %465 = vmatpush.msra.mxu0 0.0
  %466 = vmatpush.msra.mxu0 0.0
  %467 = vmatpush.msra.mxu0 0.0
  %468 = vmatpush.msra.mxu0 0.0
  %469 = vmatpush.msra.mxu0 0.0
  %470 = vmatpush.msra.mxu0 0.0
  %471 = vmatpush.msra.mxu0 0.0
  %472 = vmatpush.msra.mxu0 %v26
  %473 = vmatpush.msra.mxu0 %v25
  %474 = vmatpush.msra.mxu0 %v24
  %475 = vmatpush.msra.mxu0 %v23
  %476 = vmatmul.f32.gmra.mxu0 %v458
  %v477 = vpop.f32.mrf.mxu0
  %v478 = vadd.f32 0.0, %v477
  %479 = vdwg.mxu0
  %v480 = vadd.f32 %v457, %v478
  %v481 = vtanh.pop %v480
  %v482 = vxor.u32 %v480, 2147483648
  %v483 = vmul.f32 %v482, 1.442695
  %v484 = vpow.pop %v483
  %v485 = vadd.f32 %v484, 1.0
  %v486 = vrcp.pop %v485
  %v487 = vmul.f32 %v485, %v486
  %v488 = vsub.f32 1.0, %v487
  %v489 = vmul.f32 %v486, %v488
  %v490 = vadd.f32 %v486, %v489
  %vm491 = vweird.f32 %v485
  %vm492 = vweird.f32 %v486
  %vm493 = vmor %vm491, %vm492
  %v494 = vsel %vm493, %v486, %v490
  %v495 = vand.u32 2147483647, %v485
  %vm496 = vcmp.eq.f32.partialorder %v495, 8.507059e+37
  %v497 = vand.u32 %v485, 2147483648
  %v498 = vor.u32 1.1754944e-38, %v497
  %v499 = vsel %vm496, %v498, %v494
  %v500 = vmul.f32 1.0, %v499
  %v501 = vsel %vm31, %v481, %v500
  %v502 = vmul.f32 %v501, %v443
  %504 = vrot.lane.b32.xlu0 %v501, 64
  %v505 = vpop.permute.xlu0 %504
  %v507 = vmul.f32 %v501, %v505
  %509 = vrot.lane.b32.xlu0 %v507, 32
  %v510 = vpop.permute.xlu0 %509
  %v512 = vadd.f32 %v502, %v510
  %v513 = vtanh.pop %v512
  %515 = vrot.lane.b32.xlu0 %v513, 64
  %v516 = vpop.permute.xlu0 %515
  %v518 = vmul.f32 %v501, %v516
  %520 = vrot.lane.b32.xlu0 %v518, 32
  %v521 = vpop.permute.xlu0 %520
  %523 = vst.msk [vmem:[%s174] sm:$0xff] %vm100, %v521
  %524 = vst.msk [vmem:[%s172] sm:$0xff] %vm103, %v521
  %s525 = scalar_lea.vmem %s0, 56
  %v526 = vld [vmem:[%s525] sm:$0xff]
  %v527 = vsel %vm33, %v521, 0
  %529 = vmatpush.msra.mxu0 0.0
  %530 = vmatpush.msra.mxu0 0.0
  %531 = vmatpush.msra.mxu0 0.0
  %532 = vmatpush.msra.mxu0 0.0
  %533 = vmatpush.msra.mxu0 0.0
  %534 = vmatpush.msra.mxu0 0.0
  %535 = vmatpush.msra.mxu0 0.0
  %536 = vmatpush.msra.mxu0 0.0
  %537 = vmatpush.msra.mxu0 0.0
  %538 = vmatpush.msra.mxu0 0.0
  %539 = vmatpush.msra.mxu0 0.0
  %540 = vmatpush.msra.mxu0 0.0
  %541 = vmatpush.msra.mxu0 %v26
  %542 = vmatpush.msra.mxu0 %v25
  %543 = vmatpush.msra.mxu0 %v24
  %544 = vmatpush.msra.mxu0 %v23
  %545 = vmatmul.f32.gmra.mxu0 %v527
  %v546 = vpop.f32.mrf.mxu0
  %v547 = vadd.f32 0.0, %v546
  %548 = vdwg.mxu0
  %v549 = vadd.f32 %v526, %v547
  %v550 = vtanh.pop %v549
  %v551 = vxor.u32 %v549, 2147483648
  %v552 = vmul.f32 %v551, 1.442695
  %v553 = vpow.pop %v552
  %v554 = vadd.f32 %v553, 1.0
  %v555 = vrcp.pop %v554
  %v556 = vmul.f32 %v554, %v555
  %v557 = vsub.f32 1.0, %v556
  %v558 = vmul.f32 %v555, %v557
  %v559 = vadd.f32 %v555, %v558
  %vm560 = vweird.f32 %v554
  %vm561 = vweird.f32 %v555
  %vm562 = vmor %vm560, %vm561
  %v563 = vsel %vm562, %v555, %v559
  %v564 = vand.u32 2147483647, %v554
  %vm565 = vcmp.eq.f32.partialorder %v564, 8.507059e+37
  %v566 = vand.u32 %v554, 2147483648
  %v567 = vor.u32 1.1754944e-38, %v566
  %v568 = vsel %vm565, %v567, %v563
  %v569 = vmul.f32 1.0, %v568
  %v570 = vsel %vm31, %v550, %v569
  %v571 = vmul.f32 %v570, %v512
  %573 = vrot.lane.b32.xlu0 %v570, 64
  %v574 = vpop.permute.xlu0 %573
  %v576 = vmul.f32 %v570, %v574
  %578 = vrot.lane.b32.xlu0 %v576, 32
  %v579 = vpop.permute.xlu0 %578
  %v581 = vadd.f32 %v571, %v579
  %v582 = vtanh.pop %v581
  %584 = vrot.lane.b32.xlu0 %v582, 64
  %v585 = vpop.permute.xlu0 %584
  %v587 = vmul.f32 %v570, %v585
  %589 = vrot.lane.b32.xlu0 %v587, 32
  %v590 = vpop.permute.xlu0 %589
  %592 = vst.msk [vmem:[%s102] sm:$0xff] %vm100, %v590
  %593 = vst.msk [vmem:[#allocation2] sm:$0xff] %vm103, %v590
  %v594 = vld [vmem:[#allocation2] sm:$0xff]
  %v595 = vld [vmem:[#allocation2 + $0x8] sm:$0xff]
  %v596 = vld [vmem:[#allocation2 + $0x10] sm:$0xff]
  %v597 = vld [vmem:[#allocation2 + $0x18] sm:$0xff]
  %v598 = vld [vmem:[#allocation2 + $0x20] sm:$0xff]
  %v599 = vld [vmem:[#allocation2 + $0x28] sm:$0xff]
  %v600 = vld [vmem:[#allocation2 + $0x30] sm:$0xff]
  %v601 = vld [vmem:[#allocation2 + $0x38] sm:$0xff]
  %v602 = vld [vmem:[%s2] sm:$0xff]
  %v603 = vld [vmem:[%s2 + $0x8] sm:$0xff]
  %v604 = vld [vmem:[%s2 + $0x10] sm:$0xff]
  %v605 = vld [vmem:[%s2 + $0x18] sm:$0xff]
  %v606 = vld [vmem:[%s3] sm:$0xff]
  %v607 = vld [vmem:[%s3 + $0x8] sm:$0xff]
  %v608 = vld [vmem:[%s3 + $0x10] sm:$0xff]
  %v609 = vld [vmem:[%s3 + $0x18] sm:$0xff]
  %v610 = vld [vmem:[%s4] sm:$0x1]
  %v612 = vperm.slane %v610, 0
  %v615 = vsel %vm33, %v594, 0
  %v618 = vsel %vm33, %v595, 0
  %v621 = vsel %vm33, %v596, 0
  %v624 = vsel %vm33, %v597, 0
  %v627 = vsel %vm33, %v598, 0
  %v630 = vsel %vm33, %v599, 0
  %v633 = vsel %vm33, %v600, 0
  %v636 = vsel %vm33, %v601, 0
  %638 = vmatpush.msra.mxu0 0.0
  %639 = vmatpush.msra.mxu0 0.0
  %640 = vmatpush.msra.mxu0 0.0
  %641 = vmatpush.msra.mxu0 0.0
  %642 = vmatpush.msra.mxu0 0.0
  %643 = vmatpush.msra.mxu0 0.0
  %644 = vmatpush.msra.mxu0 0.0
  %645 = vmatpush.msra.mxu0 0.0
  %646 = vmatpush.msra.mxu0 0.0
  %647 = vmatpush.msra.mxu0 0.0
  %648 = vmatpush.msra.mxu0 0.0
  %649 = vmatpush.msra.mxu0 0.0
  %650 = vmatpush.msra.mxu0 %v605
  %651 = vmatpush.msra.mxu0 %v604
  %652 = vmatpush.msra.mxu0 %v603
  %653 = vmatpush.msra.mxu0 %v602
  %654 = vmatmul.f32.gmra.mxu0 %v615
  %v655 = vpop.f32.mrf.mxu0
  %v656 = vadd.f32 %v612, %v655
  %657 = vmatmul.f32.gmra.mxu0 %v618
  %v658 = vpop.f32.mrf.mxu0
  %v659 = vadd.f32 %v612, %v658
  %660 = vmatmul.f32.gmra.mxu0 %v621
  %v661 = vpop.f32.mrf.mxu0
  %v662 = vadd.f32 %v612, %v661
  %663 = vmatmul.f32.gmra.mxu0 %v624
  %v664 = vpop.f32.mrf.mxu0
  %v665 = vadd.f32 %v612, %v664
  %666 = vmatmul.f32.gmra.mxu0 %v627
  %v667 = vpop.f32.mrf.mxu0
  %v668 = vadd.f32 %v612, %v667
  %669 = vmatmul.f32.gmra.mxu0 %v630
  %v670 = vpop.f32.mrf.mxu0
  %v671 = vadd.f32 %v612, %v670
  %672 = vmatmul.f32.gmra.mxu0 %v633
  %v673 = vpop.f32.mrf.mxu0
  %v674 = vadd.f32 %v612, %v673
  %675 = vmatmul.f32.gmra.mxu0 %v636
  %v676 = vpop.f32.mrf.mxu0
  %v677 = vadd.f32 %v612, %v676
  %678 = vdwg.mxu0
  %679 = vmatpush.msra.mxu0 0.0
  %680 = vmatpush.msra.mxu0 0.0
  %681 = vmatpush.msra.mxu0 0.0
  %682 = vmatpush.msra.mxu0 0.0
  %683 = vmatpush.msra.mxu0 0.0
  %684 = vmatpush.msra.mxu0 0.0
  %685 = vmatpush.msra.mxu0 0.0
  %686 = vmatpush.msra.mxu0 0.0
  %687 = vmatpush.msra.mxu0 0.0
  %688 = vmatpush.msra.mxu0 0.0
  %689 = vmatpush.msra.mxu0 0.0
  %690 = vmatpush.msra.mxu0 0.0
  %691 = vmatpush.msra.mxu0 %v609
  %692 = vmatpush.msra.mxu0 %v608
  %693 = vmatpush.msra.mxu0 %v607
  %694 = vmatpush.msra.mxu0 %v606
  %695 = vmatmul.f32.gmra.mxu0 %v35
  %v696 = vpop.f32.mrf.mxu0
  %v697 = vadd.f32 0.0, %v696
  %698 = vdwg.mxu0
  %v699 = vadd.f32 %v656, %v697
  %v700 = vtanh.pop %v699
  %v701 = vxor.u32 %v699, 2147483648
  %v702 = vmul.f32 %v701, 1.442695
  %v703 = vpow.pop %v702
  %v704 = vadd.f32 %v703, 1.0
  %v705 = vrcp.pop %v704
  %v706 = vmul.f32 %v704, %v705
  %v707 = vsub.f32 1.0, %v706
  %v708 = vmul.f32 %v705, %v707
  %v709 = vadd.f32 %v705, %v708
  %vm710 = vweird.f32 %v704
  %vm711 = vweird.f32 %v705
  %vm712 = vmor %vm710, %vm711
  %v713 = vsel %vm712, %v705, %v709
  %v714 = vand.u32 2147483647, %v704
  %vm715 = vcmp.eq.f32.partialorder %v714, 8.507059e+37
  %v716 = vand.u32 %v704, 2147483648
  %v717 = vor.u32 1.1754944e-38, %v716
  %v718 = vsel %vm715, %v717, %v713
  %v719 = vmul.f32 1.0, %v718
  %v720 = vsel %vm31, %v700, %v719
  %v721 = vmul.f32 %v720, 0.0
  %723 = vrot.lane.b32.xlu0 %v720, 64
  %v724 = vpop.permute.xlu0 %723
  %v726 = vmul.f32 %v720, %v724
  %728 = vrot.lane.b32.xlu0 %v726, 32
  %v729 = vpop.permute.xlu0 %728
  %v731 = vadd.f32 %v721, %v729
  %v732 = vtanh.pop %v731
  %734 = vrot.lane.b32.xlu0 %v732, 64
  %v735 = vpop.permute.xlu0 %734
  %v737 = vmul.f32 %v720, %v735
  %739 = vrot.lane.b32.xlu0 %v737, 32
  %v740 = vpop.permute.xlu0 %739
  %742 = vst.msk [vmem:[%s5] sm:$0xff] %vm33, %v740
  %v743 = vsel %vm33, %v740, 0
  %745 = vmatpush.msra.mxu0 0.0
  %746 = vmatpush.msra.mxu0 0.0
  %747 = vmatpush.msra.mxu0 0.0
  %748 = vmatpush.msra.mxu0 0.0
  %749 = vmatpush.msra.mxu0 0.0
  %750 = vmatpush.msra.mxu0 0.0
  %751 = vmatpush.msra.mxu0 0.0
  %752 = vmatpush.msra.mxu0 0.0
  %753 = vmatpush.msra.mxu0 0.0
  %754 = vmatpush.msra.mxu0 0.0
  %755 = vmatpush.msra.mxu0 0.0
  %756 = vmatpush.msra.mxu0 0.0
  %757 = vmatpush.msra.mxu0 %v609
  %758 = vmatpush.msra.mxu0 %v608
  %759 = vmatpush.msra.mxu0 %v607
  %760 = vmatpush.msra.mxu0 %v606
  %761 = vmatmul.f32.gmra.mxu0 %v743
  %v762 = vpop.f32.mrf.mxu0
  %v763 = vadd.f32 0.0, %v762
  %764 = vdwg.mxu0
  %v765 = vadd.f32 %v659, %v763
  %v766 = vtanh.pop %v765
  %v767 = vxor.u32 %v765, 2147483648
  %v768 = vmul.f32 %v767, 1.442695
  %v769 = vpow.pop %v768
  %v770 = vadd.f32 %v769, 1.0
  %v771 = vrcp.pop %v770
  %v772 = vmul.f32 %v770, %v771
  %v773 = vsub.f32 1.0, %v772
  %v774 = vmul.f32 %v771, %v773
  %v775 = vadd.f32 %v771, %v774
  %vm776 = vweird.f32 %v770
  %vm777 = vweird.f32 %v771
  %vm778 = vmor %vm776, %vm777
  %v779 = vsel %vm778, %v771, %v775
  %v780 = vand.u32 2147483647, %v770
  %vm781 = vcmp.eq.f32.partialorder %v780, 8.507059e+37
  %v782 = vand.u32 %v770, 2147483648
  %v783 = vor.u32 1.1754944e-38, %v782
  %v784 = vsel %vm781, %v783, %v779
  %v785 = vmul.f32 1.0, %v784
  %v786 = vsel %vm31, %v766, %v785
  %v787 = vmul.f32 %v786, %v731
  %789 = vrot.lane.b32.xlu0 %v786, 64
  %v790 = vpop.permute.xlu0 %789
  %v792 = vmul.f32 %v786, %v790
  %794 = vrot.lane.b32.xlu0 %v792, 32
  %v795 = vpop.permute.xlu0 %794
  %v797 = vadd.f32 %v787, %v795
  %v798 = vtanh.pop %v797
  %800 = vrot.lane.b32.xlu0 %v798, 64
  %v801 = vpop.permute.xlu0 %800
  %v803 = vmul.f32 %v786, %v801
  %805 = vrot.lane.b32.xlu0 %v803, 32
  %v806 = vpop.permute.xlu0 %805
  %s808 = scalar_lea.vmem %s5, 8
  %809 = vst.msk [vmem:[%s808] sm:$0xff] %vm33, %v806
  %v810 = vsel %vm33, %v806, 0
  %812 = vmatpush.msra.mxu0 0.0
  %813 = vmatpush.msra.mxu0 0.0
  %814 = vmatpush.msra.mxu0 0.0
  %815 = vmatpush.msra.mxu0 0.0
  %816 = vmatpush.msra.mxu0 0.0
  %817 = vmatpush.msra.mxu0 0.0
  %818 = vmatpush.msra.mxu0 0.0
  %819 = vmatpush.msra.mxu0 0.0
  %820 = vmatpush.msra.mxu0 0.0
  %821 = vmatpush.msra.mxu0 0.0
  %822 = vmatpush.msra.mxu0 0.0
  %823 = vmatpush.msra.mxu0 0.0
  %824 = vmatpush.msra.mxu0 %v609
  %825 = vmatpush.msra.mxu0 %v608
  %826 = vmatpush.msra.mxu0 %v607
  %827 = vmatpush.msra.mxu0 %v606
  %828 = vmatmul.f32.gmra.mxu0 %v810
  %v829 = vpop.f32.mrf.mxu0
  %v830 = vadd.f32 0.0, %v829
  %831 = vdwg.mxu0
  %v832 = vadd.f32 %v662, %v830
  %v833 = vtanh.pop %v832
  %v834 = vxor.u32 %v832, 2147483648
  %v835 = vmul.f32 %v834, 1.442695
  %v836 = vpow.pop %v835
  %v837 = vadd.f32 %v836, 1.0
  %v838 = vrcp.pop %v837
  %v839 = vmul.f32 %v837, %v838
  %v840 = vsub.f32 1.0, %v839
  %v841 = vmul.f32 %v838, %v840
  %v842 = vadd.f32 %v838, %v841
  %vm843 = vweird.f32 %v837
  %vm844 = vweird.f32 %v838
  %vm845 = vmor %vm843, %vm844
  %v846 = vsel %vm845, %v838, %v842
  %v847 = vand.u32 2147483647, %v837
  %vm848 = vcmp.eq.f32.partialorder %v847, 8.507059e+37
  %v849 = vand.u32 %v837, 2147483648
  %v850 = vor.u32 1.1754944e-38, %v849
  %v851 = vsel %vm848, %v850, %v846
  %v852 = vmul.f32 1.0, %v851
  %v853 = vsel %vm31, %v833, %v852
  %v854 = vmul.f32 %v853, %v797
  %856 = vrot.lane.b32.xlu0 %v853, 64
  %v857 = vpop.permute.xlu0 %856
  %v859 = vmul.f32 %v853, %v857
  %861 = vrot.lane.b32.xlu0 %v859, 32
  %v862 = vpop.permute.xlu0 %861
  %v864 = vadd.f32 %v854, %v862
  %v865 = vtanh.pop %v864
  %867 = vrot.lane.b32.xlu0 %v865, 64
  %v868 = vpop.permute.xlu0 %867
  %v870 = vmul.f32 %v853, %v868
  %872 = vrot.lane.b32.xlu0 %v870, 32
  %v873 = vpop.permute.xlu0 %872
  %s875 = scalar_lea.vmem %s5, 16
  %876 = vst.msk [vmem:[%s875] sm:$0xff] %vm33, %v873
  %v877 = vsel %vm33, %v873, 0
  %879 = vmatpush.msra.mxu0 0.0
  %880 = vmatpush.msra.mxu0 0.0
  %881 = vmatpush.msra.mxu0 0.0
  %882 = vmatpush.msra.mxu0 0.0
  %883 = vmatpush.msra.mxu0 0.0
  %884 = vmatpush.msra.mxu0 0.0
  %885 = vmatpush.msra.mxu0 0.0
  %886 = vmatpush.msra.mxu0 0.0
  %887 = vmatpush.msra.mxu0 0.0
  %888 = vmatpush.msra.mxu0 0.0
  %889 = vmatpush.msra.mxu0 0.0
  %890 = vmatpush.msra.mxu0 0.0
  %891 = vmatpush.msra.mxu0 %v609
  %892 = vmatpush.msra.mxu0 %v608
  %893 = vmatpush.msra.mxu0 %v607
  %894 = vmatpush.msra.mxu0 %v606
  %895 = vmatmul.f32.gmra.mxu0 %v877
  %v896 = vpop.f32.mrf.mxu0
  %v897 = vadd.f32 0.0, %v896
  %898 = vdwg.mxu0
  %v899 = vadd.f32 %v665, %v897
  %v900 = vtanh.pop %v899
  %v901 = vxor.u32 %v899, 2147483648
  %v902 = vmul.f32 %v901, 1.442695
  %v903 = vpow.pop %v902
  %v904 = vadd.f32 %v903, 1.0
  %v905 = vrcp.pop %v904
  %v906 = vmul.f32 %v904, %v905
  %v907 = vsub.f32 1.0, %v906
  %v908 = vmul.f32 %v905, %v907
  %v909 = vadd.f32 %v905, %v908
  %vm910 = vweird.f32 %v904
  %vm911 = vweird.f32 %v905
  %vm912 = vmor %vm910, %vm911
  %v913 = vsel %vm912, %v905, %v909
  %v914 = vand.u32 2147483647, %v904
  %vm915 = vcmp.eq.f32.partialorder %v914, 8.507059e+37
  %v916 = vand.u32 %v904, 2147483648
  %v917 = vor.u32 1.1754944e-38, %v916
  %v918 = vsel %vm915, %v917, %v913
  %v919 = vmul.f32 1.0, %v918
  %v920 = vsel %vm31, %v900, %v919
  %v921 = vmul.f32 %v920, %v864
  %923 = vrot.lane.b32.xlu0 %v920, 64
  %v924 = vpop.permute.xlu0 %923
  %v926 = vmul.f32 %v920, %v924
  %928 = vrot.lane.b32.xlu0 %v926, 32
  %v929 = vpop.permute.xlu0 %928
  %v931 = vadd.f32 %v921, %v929
  %v932 = vtanh.pop %v931
  %934 = vrot.lane.b32.xlu0 %v932, 64
  %v935 = vpop.permute.xlu0 %934
  %v937 = vmul.f32 %v920, %v935
  %939 = vrot.lane.b32.xlu0 %v937, 32
  %v940 = vpop.permute.xlu0 %939
  %s942 = scalar_lea.vmem %s5, 24
  %943 = vst.msk [vmem:[%s942] sm:$0xff] %vm33, %v940
  %v944 = vsel %vm33, %v940, 0
  %946 = vmatpush.msra.mxu0 0.0
  %947 = vmatpush.msra.mxu0 0.0
  %948 = vmatpush.msra.mxu0 0.0
  %949 = vmatpush.msra.mxu0 0.0
  %950 = vmatpush.msra.mxu0 0.0
  %951 = vmatpush.msra.mxu0 0.0
  %952 = vmatpush.msra.mxu0 0.0
  %953 = vmatpush.msra.mxu0 0.0
  %954 = vmatpush.msra.mxu0 0.0
  %955 = vmatpush.msra.mxu0 0.0
  %956 = vmatpush.msra.mxu0 0.0
  %957 = vmatpush.msra.mxu0 0.0
  %958 = vmatpush.msra.mxu0 %v609
  %959 = vmatpush.msra.mxu0 %v608
  %960 = vmatpush.msra.mxu0 %v607
  %961 = vmatpush.msra.mxu0 %v606
  %962 = vmatmul.f32.gmra.mxu0 %v944
  %v963 = vpop.f32.mrf.mxu0
  %v964 = vadd.f32 0.0, %v963
  %965 = vdwg.mxu0
  %v966 = vadd.f32 %v668, %v964
  %v967 = vtanh.pop %v966
  %v968 = vxor.u32 %v966, 2147483648
  %v969 = vmul.f32 %v968, 1.442695
  %v970 = vpow.pop %v969
  %v971 = vadd.f32 %v970, 1.0
  %v972 = vrcp.pop %v971
  %v973 = vmul.f32 %v971, %v972
  %v974 = vsub.f32 1.0, %v973
  %v975 = vmul.f32 %v972, %v974
  %v976 = vadd.f32 %v972, %v975
  %vm977 = vweird.f32 %v971
  %vm978 = vweird.f32 %v972
  %vm979 = vmor %vm977, %vm978
  %v980 = vsel %vm979, %v972, %v976
  %v981 = vand.u32 2147483647, %v971
  %vm982 = vcmp.eq.f32.partialorder %v981, 8.507059e+37
  %v983 = vand.u32 %v971, 2147483648
  %v984 = vor.u32 1.1754944e-38, %v983
  %v985 = vsel %vm982, %v984, %v980
  %v986 = vmul.f32 1.0, %v985
  %v987 = vsel %vm31, %v967, %v986
  %v988 = vmul.f32 %v987, %v931
  %990 = vrot.lane.b32.xlu0 %v987, 64
  %v991 = vpop.permute.xlu0 %990
  %v993 = vmul.f32 %v987, %v991
  %995 = vrot.lane.b32.xlu0 %v993, 32
  %v996 = vpop.permute.xlu0 %995
  %v998 = vadd.f32 %v988, %v996
  %v999 = vtanh.pop %v998
  %1001 = vrot.lane.b32.xlu0 %v999, 64
  %v1002 = vpop.permute.xlu0 %1001
  %v1004 = vmul.f32 %v987, %v1002
  %1006 = vrot.lane.b32.xlu0 %v1004, 32
  %v1007 = vpop.permute.xlu0 %1006
  %s1009 = scalar_lea.vmem %s5, 32
  %1010 = vst.msk [vmem:[%s1009] sm:$0xff] %vm33, %v1007
  %v1011 = vsel %vm33, %v1007, 0
  %1013 = vmatpush.msra.mxu0 0.0
  %1014 = vmatpush.msra.mxu0 0.0
  %1015 = vmatpush.msra.mxu0 0.0
  %1016 = vmatpush.msra.mxu0 0.0
  %1017 = vmatpush.msra.mxu0 0.0
  %1018 = vmatpush.msra.mxu0 0.0
  %1019 = vmatpush.msra.mxu0 0.0
  %1020 = vmatpush.msra.mxu0 0.0
  %1021 = vmatpush.msra.mxu0 0.0
  %1022 = vmatpush.msra.mxu0 0.0
  %1023 = vmatpush.msra.mxu0 0.0
  %1024 = vmatpush.msra.mxu0 0.0
  %1025 = vmatpush.msra.mxu0 %v609
  %1026 = vmatpush.msra.mxu0 %v608
  %1027 = vmatpush.msra.mxu0 %v607
  %1028 = vmatpush.msra.mxu0 %v606
  %1029 = vmatmul.f32.gmra.mxu0 %v1011
  %v1030 = vpop.f32.mrf.mxu0
  %v1031 = vadd.f32 0.0, %v1030
  %1032 = vdwg.mxu0
  %v1033 = vadd.f32 %v671, %v1031
  %v1034 = vtanh.pop %v1033
  %v1035 = vxor.u32 %v1033, 2147483648
  %v1036 = vmul.f32 %v1035, 1.442695
  %v1037 = vpow.pop %v1036
  %v1038 = vadd.f32 %v1037, 1.0
  %v1039 = vrcp.pop %v1038
  %v1040 = vmul.f32 %v1038, %v1039
  %v1041 = vsub.f32 1.0, %v1040
  %v1042 = vmul.f32 %v1039, %v1041
  %v1043 = vadd.f32 %v1039, %v1042
  %vm1044 = vweird.f32 %v1038
  %vm1045 = vweird.f32 %v1039
  %vm1046 = vmor %vm1044, %vm1045
  %v1047 = vsel %vm1046, %v1039, %v1043
  %v1048 = vand.u32 2147483647, %v1038
  %vm1049 = vcmp.eq.f32.partialorder %v1048, 8.507059e+37
  %v1050 = vand.u32 %v1038, 2147483648
  %v1051 = vor.u32 1.1754944e-38, %v1050
  %v1052 = vsel %vm1049, %v1051, %v1047
  %v1053 = vmul.f32 1.0, %v1052
  %v1054 = vsel %vm31, %v1034, %v1053
  %v1055 = vmul.f32 %v1054, %v998
  %1057 = vrot.lane.b32.xlu0 %v1054, 64
  %v1058 = vpop.permute.xlu0 %1057
  %v1060 = vmul.f32 %v1054, %v1058
  %1062 = vrot.lane.b32.xlu0 %v1060, 32
  %v1063 = vpop.permute.xlu0 %1062
  %v1065 = vadd.f32 %v1055, %v1063
  %v1066 = vtanh.pop %v1065
  %1068 = vrot.lane.b32.xlu0 %v1066, 64
  %v1069 = vpop.permute.xlu0 %1068
  %v1071 = vmul.f32 %v1054, %v1069
  %1073 = vrot.lane.b32.xlu0 %v1071, 32
  %v1074 = vpop.permute.xlu0 %1073
  %s1076 = scalar_lea.vmem %s5, 40
  %1077 = vst.msk [vmem:[%s1076] sm:$0xff] %vm33, %v1074
  %v1078 = vsel %vm33, %v1074, 0
  %1080 = vmatpush.msra.mxu0 0.0
  %1081 = vmatpush.msra.mxu0 0.0
  %1082 = vmatpush.msra.mxu0 0.0
  %1083 = vmatpush.msra.mxu0 0.0
  %1084 = vmatpush.msra.mxu0 0.0
  %1085 = vmatpush.msra.mxu0 0.0
  %1086 = vmatpush.msra.mxu0 0.0
  %1087 = vmatpush.msra.mxu0 0.0
  %1088 = vmatpush.msra.mxu0 0.0
  %1089 = vmatpush.msra.mxu0 0.0
  %1090 = vmatpush.msra.mxu0 0.0
  %1091 = vmatpush.msra.mxu0 0.0
  %1092 = vmatpush.msra.mxu0 %v609
  %1093 = vmatpush.msra.mxu0 %v608
  %1094 = vmatpush.msra.mxu0 %v607
  %1095 = vmatpush.msra.mxu0 %v606
  %1096 = vmatmul.f32.gmra.mxu0 %v1078
  %v1097 = vpop.f32.mrf.mxu0
  %v1098 = vadd.f32 0.0, %v1097
  %1099 = vdwg.mxu0
  %v1100 = vadd.f32 %v674, %v1098
  %v1101 = vtanh.pop %v1100
  %v1102 = vxor.u32 %v1100, 2147483648
  %v1103 = vmul.f32 %v1102, 1.442695
  %v1104 = vpow.pop %v1103
  %v1105 = vadd.f32 %v1104, 1.0
  %v1106 = vrcp.pop %v1105
  %v1107 = vmul.f32 %v1105, %v1106
  %v1108 = vsub.f32 1.0, %v1107
  %v1109 = vmul.f32 %v1106, %v1108
  %v1110 = vadd.f32 %v1106, %v1109
  %vm1111 = vweird.f32 %v1105
  %vm1112 = vweird.f32 %v1106
  %vm1113 = vmor %vm1111, %vm1112
  %v1114 = vsel %vm1113, %v1106, %v1110
  %v1115 = vand.u32 2147483647, %v1105
  %vm1116 = vcmp.eq.f32.partialorder %v1115, 8.507059e+37
  %v1117 = vand.u32 %v1105, 2147483648
  %v1118 = vor.u32 1.1754944e-38, %v1117
  %v1119 = vsel %vm1116, %v1118, %v1114
  %v1120 = vmul.f32 1.0, %v1119
  %v1121 = vsel %vm31, %v1101, %v1120
  %v1122 = vmul.f32 %v1121, %v1065
  %1124 = vrot.lane.b32.xlu0 %v1121, 64
  %v1125 = vpop.permute.xlu0 %1124
  %v1127 = vmul.f32 %v1121, %v1125
  %1129 = vrot.lane.b32.xlu0 %v1127, 32
  %v1130 = vpop.permute.xlu0 %1129
  %v1132 = vadd.f32 %v1122, %v1130
  %v1133 = vtanh.pop %v1132
  %1135 = vrot.lane.b32.xlu0 %v1133, 64
  %v1136 = vpop.permute.xlu0 %1135
  %v1138 = vmul.f32 %v1121, %v1136
  %1140 = vrot.lane.b32.xlu0 %v1138, 32
  %v1141 = vpop.permute.xlu0 %1140
  %s1143 = scalar_lea.vmem %s5, 48
  %1144 = vst.msk [vmem:[%s1143] sm:$0xff] %vm33, %v1141
  %v1145 = vsel %vm33, %v1141, 0
  %1147 = vmatpush.msra.mxu0 0.0
  %1148 = vmatpush.msra.mxu0 0.0
  %1149 = vmatpush.msra.mxu0 0.0
  %1150 = vmatpush.msra.mxu0 0.0
  %1151 = vmatpush.msra.mxu0 0.0
  %1152 = vmatpush.msra.mxu0 0.0
  %1153 = vmatpush.msra.mxu0 0.0
  %1154 = vmatpush.msra.mxu0 0.0
  %1155 = vmatpush.msra.mxu0 0.0
  %1156 = vmatpush.msra.mxu0 0.0
  %1157 = vmatpush.msra.mxu0 0.0
  %1158 = vmatpush.msra.mxu0 0.0
  %1159 = vmatpush.msra.mxu0 %v609
  %1160 = vmatpush.msra.mxu0 %v608
  %1161 = vmatpush.msra.mxu0 %v607
  %1162 = vmatpush.msra.mxu0 %v606
  %1163 = vmatmul.f32.gmra.mxu0 %v1145
  %v1164 = vpop.f32.mrf.mxu0
  %v1165 = vadd.f32 0.0, %v1164
  %1166 = vdwg.mxu0
  %v1167 = vadd.f32 %v677, %v1165
  %v1168 = vtanh.pop %v1167
  %v1169 = vxor.u32 %v1167, 2147483648
  %v1170 = vmul.f32 %v1169, 1.442695
  %v1171 = vpow.pop %v1170
  %v1172 = vadd.f32 %v1171, 1.0
  %v1173 = vrcp.pop %v1172
  %v1174 = vmul.f32 %v1172, %v1173
  %v1175 = vsub.f32 1.0, %v1174
  %v1176 = vmul.f32 %v1173, %v1175
  %v1177 = vadd.f32 %v1173, %v1176
  %vm1178 = vweird.f32 %v1172
  %vm1179 = vweird.f32 %v1173
  %vm1180 = vmor %vm1178, %vm1179
  %v1181 = vsel %vm1180, %v1173, %v1177
  %v1182 = vand.u32 2147483647, %v1172
  %vm1183 = vcmp.eq.f32.partialorder %v1182, 8.507059e+37
  %v1184 = vand.u32 %v1172, 2147483648
  %v1185 = vor.u32 1.1754944e-38, %v1184
  %v1186 = vsel %vm1183, %v1185, %v1181
  %v1187 = vmul.f32 1.0, %v1186
  %v1188 = vsel %vm31, %v1168, %v1187
  %v1189 = vmul.f32 %v1188, %v1132
  %1191 = vrot.lane.b32.xlu0 %v1188, 64
  %v1192 = vpop.permute.xlu0 %1191
  %v1194 = vmul.f32 %v1188, %v1192
  %1196 = vrot.lane.b32.xlu0 %v1194, 32
  %v1197 = vpop.permute.xlu0 %1196
  %v1199 = vadd.f32 %v1189, %v1197
  %v1200 = vtanh.pop %v1199
  %1202 = vrot.lane.b32.xlu0 %v1200, 64
  %v1203 = vpop.permute.xlu0 %1202
  %v1205 = vmul.f32 %v1188, %v1203
  %1207 = vrot.lane.b32.xlu0 %v1205, 32
  %v1208 = vpop.permute.xlu0 %1207
  %s1210 = scalar_lea.vmem %s5, 56
  %1211 = vst.msk [vmem:[%s1210] sm:$0xff] %vm33, %v1208
  %1212 = vst.msk [vmem:[%s6] sm:$0xff] %vm33, %v1208
  %1214 = vrot.lane.b32.xlu0 %v1199, 96
  %v1215 = vpop.permute.xlu0 %1214
  %1217 = vst.msk [vmem:[%s7] sm:$0xff] %vm33, %v1215
  %v1218 = vld [vmem:[%s5] sm:$0xff]
  %v1219 = vld [vmem:[%s5 + $0x8] sm:$0xff]
  %v1220 = vld [vmem:[%s5 + $0x10] sm:$0xff]
  %v1221 = vld [vmem:[%s5 + $0x18] sm:$0xff]
  %v1222 = vld [vmem:[%s5 + $0x20] sm:$0xff]
  %v1223 = vld [vmem:[%s5 + $0x28] sm:$0xff]
  %v1224 = vld [vmem:[%s5 + $0x30] sm:$0xff]
  %v1225 = vld [vmem:[%s5 + $0x38] sm:$0xff]
  %s1226 = scalar_lea.vmem %s2, 32
  %v1227 = vld [vmem:[%s1226] sm:$0xff]
  %v1228 = vld [vmem:[%s1226 + $0x8] sm:$0xff]
  %v1229 = vld [vmem:[%s1226 + $0x10] sm:$0xff]
  %v1230 = vld [vmem:[%s1226 + $0x18] sm:$0xff]
  %s1231 = scalar_lea.vmem %s3, 32
  %v1232 = vld [vmem:[%s1231] sm:$0xff]
  %v1233 = vld [vmem:[%s1231 + $0x8] sm:$0xff]
  %v1234 = vld [vmem:[%s1231 + $0x10] sm:$0xff]
  %v1235 = vld [vmem:[%s1231 + $0x18] sm:$0xff]
  %s1236 = scalar_lea.vmem %s4, 1
  %v1237 = vld [vmem:[%s1236] sm:$0x1]
  %v1239 = vperm.slane %v1237, 0
  %v1242 = vsel %vm33, %v1218, 0
  %v1245 = vsel %vm33, %v1219, 0
  %v1248 = vsel %vm33, %v1220, 0
  %v1251 = vsel %vm33, %v1221, 0
  %v1254 = vsel %vm33, %v1222, 0
  %v1257 = vsel %vm33, %v1223, 0
  %v1260 = vsel %vm33, %v1224, 0
  %v1263 = vsel %vm33, %v1225, 0
  %1265 = vmatpush.msra.mxu0 0.0
  %1266 = vmatpush.msra.mxu0 0.0
  %1267 = vmatpush.msra.mxu0 0.0
  %1268 = vmatpush.msra.mxu0 0.0
  %1269 = vmatpush.msra.mxu0 0.0
  %1270 = vmatpush.msra.mxu0 0.0
  %1271 = vmatpush.msra.mxu0 0.0
  %1272 = vmatpush.msra.mxu0 0.0
  %1273 = vmatpush.msra.mxu0 0.0
  %1274 = vmatpush.msra.mxu0 0.0
  %1275 = vmatpush.msra.mxu0 0.0
  %1276 = vmatpush.msra.mxu0 0.0
  %1277 = vmatpush.msra.mxu0 %v1230
  %1278 = vmatpush.msra.mxu0 %v1229
  %1279 = vmatpush.msra.mxu0 %v1228
  %1280 = vmatpush.msra.mxu0 %v1227
  %1281 = vmatmul.f32.gmra.mxu0 %v1242
  %v1282 = vpop.f32.mrf.mxu0
  %v1283 = vadd.f32 %v1239, %v1282
  %1284 = vmatmul.f32.gmra.mxu0 %v1245
  %v1285 = vpop.f32.mrf.mxu0
  %v1286 = vadd.f32 %v1239, %v1285
  %1287 = vmatmul.f32.gmra.mxu0 %v1248
  %v1288 = vpop.f32.mrf.mxu0
  %v1289 = vadd.f32 %v1239, %v1288
  %1290 = vmatmul.f32.gmra.mxu0 %v1251
  %v1291 = vpop.f32.mrf.mxu0
  %v1292 = vadd.f32 %v1239, %v1291
  %1293 = vmatmul.f32.gmra.mxu0 %v1254
  %v1294 = vpop.f32.mrf.mxu0
  %v1295 = vadd.f32 %v1239, %v1294
  %1296 = vmatmul.f32.gmra.mxu0 %v1257
  %v1297 = vpop.f32.mrf.mxu0
  %v1298 = vadd.f32 %v1239, %v1297
  %1299 = vmatmul.f32.gmra.mxu0 %v1260
  %v1300 = vpop.f32.mrf.mxu0
  %v1301 = vadd.f32 %v1239, %v1300
  %1302 = vmatmul.f32.gmra.mxu0 %v1263
  %v1303 = vpop.f32.mrf.mxu0
  %v1304 = vadd.f32 %v1239, %v1303
  %1305 = vdwg.mxu0
  %1306 = vmatpush.msra.mxu0 0.0
  %1307 = vmatpush.msra.mxu0 0.0
  %1308 = vmatpush.msra.mxu0 0.0
  %1309 = vmatpush.msra.mxu0 0.0
  %1310 = vmatpush.msra.mxu0 0.0
  %1311 = vmatpush.msra.mxu0 0.0
  %1312 = vmatpush.msra.mxu0 0.0
  %1313 = vmatpush.msra.mxu0 0.0
  %1314 = vmatpush.msra.mxu0 0.0
  %1315 = vmatpush.msra.mxu0 0.0
  %1316 = vmatpush.msra.mxu0 0.0
  %1317 = vmatpush.msra.mxu0 0.0
  %1318 = vmatpush.msra.mxu0 %v1235
  %1319 = vmatpush.msra.mxu0 %v1234
  %1320 = vmatpush.msra.mxu0 %v1233
  %1321 = vmatpush.msra.mxu0 %v1232
  %1322 = vmatmul.f32.gmra.mxu0 %v35
  %v1323 = vpop.f32.mrf.mxu0
  %v1324 = vadd.f32 0.0, %v1323
  %1325 = vdwg.mxu0
  %v1326 = vadd.f32 %v1283, %v1324
  %v1327 = vtanh.pop %v1326
  %v1328 = vxor.u32 %v1326, 2147483648
  %v1329 = vmul.f32 %v1328, 1.442695
  %v1330 = vpow.pop %v1329
  %v1331 = vadd.f32 %v1330, 1.0
  %v1332 = vrcp.pop %v1331
  %v1333 = vmul.f32 %v1331, %v1332
  %v1334 = vsub.f32 1.0, %v1333
  %v1335 = vmul.f32 %v1332, %v1334
  %v1336 = vadd.f32 %v1332, %v1335
  %vm1337 = vweird.f32 %v1331
  %vm1338 = vweird.f32 %v1332
  %vm1339 = vmor %vm1337, %vm1338
  %v1340 = vsel %vm1339, %v1332, %v1336
  %v1341 = vand.u32 2147483647, %v1331
  %vm1342 = vcmp.eq.f32.partialorder %v1341, 8.507059e+37
  %v1343 = vand.u32 %v1331, 2147483648
  %v1344 = vor.u32 1.1754944e-38, %v1343
  %v1345 = vsel %vm1342, %v1344, %v1340
  %v1346 = vmul.f32 1.0, %v1345
  %v1347 = vsel %vm31, %v1327, %v1346
  %v1348 = vmul.f32 %v1347, 0.0
  %1350 = vrot.lane.b32.xlu0 %v1347, 64
  %v1351 = vpop.permute.xlu0 %1350
  %v1353 = vmul.f32 %v1347, %v1351
  %1355 = vrot.lane.b32.xlu0 %v1353, 32
  %v1356 = vpop.permute.xlu0 %1355
  %v1358 = vadd.f32 %v1348, %v1356
  %v1359 = vtanh.pop %v1358
  %1361 = vrot.lane.b32.xlu0 %v1359, 64
  %v1362 = vpop.permute.xlu0 %1361
  %v1364 = vmul.f32 %v1347, %v1362
  %1366 = vrot.lane.b32.xlu0 %v1364, 32
  %v1367 = vpop.permute.xlu0 %1366
  %1369 = vst.msk [vmem:[%s5] sm:$0xff] %vm33, %v1367
  %v1370 = vsel %vm33, %v1367, 0
  %1372 = vmatpush.msra.mxu0 0.0
  %1373 = vmatpush.msra.mxu0 0.0
  %1374 = vmatpush.msra.mxu0 0.0
  %1375 = vmatpush.msra.mxu0 0.0
  %1376 = vmatpush.msra.mxu0 0.0
  %1377 = vmatpush.msra.mxu0 0.0
  %1378 = vmatpush.msra.mxu0 0.0
  %1379 = vmatpush.msra.mxu0 0.0
  %1380 = vmatpush.msra.mxu0 0.0
  %1381 = vmatpush.msra.mxu0 0.0
  %1382 = vmatpush.msra.mxu0 0.0
  %1383 = vmatpush.msra.mxu0 0.0
  %1384 = vmatpush.msra.mxu0 %v1235
  %1385 = vmatpush.msra.mxu0 %v1234
  %1386 = vmatpush.msra.mxu0 %v1233
  %1387 = vmatpush.msra.mxu0 %v1232
  %1388 = vmatmul.f32.gmra.mxu0 %v1370
  %v1389 = vpop.f32.mrf.mxu0
  %v1390 = vadd.f32 0.0, %v1389
  %1391 = vdwg.mxu0
  %v1392 = vadd.f32 %v1286, %v1390
  %v1393 = vtanh.pop %v1392
  %v1394 = vxor.u32 %v1392, 2147483648
  %v1395 = vmul.f32 %v1394, 1.442695
  %v1396 = vpow.pop %v1395
  %v1397 = vadd.f32 %v1396, 1.0
  %v1398 = vrcp.pop %v1397
  %v1399 = vmul.f32 %v1397, %v1398
  %v1400 = vsub.f32 1.0, %v1399
  %v1401 = vmul.f32 %v1398, %v1400
  %v1402 = vadd.f32 %v1398, %v1401
  %vm1403 = vweird.f32 %v1397
  %vm1404 = vweird.f32 %v1398
  %vm1405 = vmor %vm1403, %vm1404
  %v1406 = vsel %vm1405, %v1398, %v1402
  %v1407 = vand.u32 2147483647, %v1397
  %vm1408 = vcmp.eq.f32.partialorder %v1407, 8.507059e+37
  %v1409 = vand.u32 %v1397, 2147483648
  %v1410 = vor.u32 1.1754944e-38, %v1409
  %v1411 = vsel %vm1408, %v1410, %v1406
  %v1412 = vmul.f32 1.0, %v1411
  %v1413 = vsel %vm31, %v1393, %v1412
  %v1414 = vmul.f32 %v1413, %v1358
  %1416 = vrot.lane.b32.xlu0 %v1413, 64
  %v1417 = vpop.permute.xlu0 %1416
  %v1419 = vmul.f32 %v1413, %v1417
  %1421 = vrot.lane.b32.xlu0 %v1419, 32
  %v1422 = vpop.permute.xlu0 %1421
  %v1424 = vadd.f32 %v1414, %v1422
  %v1425 = vtanh.pop %v1424
  %1427 = vrot.lane.b32.xlu0 %v1425, 64
  %v1428 = vpop.permute.xlu0 %1427
  %v1430 = vmul.f32 %v1413, %v1428
  %1432 = vrot.lane.b32.xlu0 %v1430, 32
  %v1433 = vpop.permute.xlu0 %1432
  %1435 = vst.msk [vmem:[%s808] sm:$0xff] %vm33, %v1433
  %v1436 = vsel %vm33, %v1433, 0
  %1438 = vmatpush.msra.mxu0 0.0
  %1439 = vmatpush.msra.mxu0 0.0
  %1440 = vmatpush.msra.mxu0 0.0
  %1441 = vmatpush.msra.mxu0 0.0
  %1442 = vmatpush.msra.mxu0 0.0
  %1443 = vmatpush.msra.mxu0 0.0
  %1444 = vmatpush.msra.mxu0 0.0
  %1445 = vmatpush.msra.mxu0 0.0
  %1446 = vmatpush.msra.mxu0 0.0
  %1447 = vmatpush.msra.mxu0 0.0
  %1448 = vmatpush.msra.mxu0 0.0
  %1449 = vmatpush.msra.mxu0 0.0
  %1450 = vmatpush.msra.mxu0 %v1235
  %1451 = vmatpush.msra.mxu0 %v1234
  %1452 = vmatpush.msra.mxu0 %v1233
  %1453 = vmatpush.msra.mxu0 %v1232
  %1454 = vmatmul.f32.gmra.mxu0 %v1436
  %v1455 = vpop.f32.mrf.mxu0
  %v1456 = vadd.f32 0.0, %v1455
  %1457 = vdwg.mxu0
  %v1458 = vadd.f32 %v1289, %v1456
  %v1459 = vtanh.pop %v1458
  %v1460 = vxor.u32 %v1458, 2147483648
  %v1461 = vmul.f32 %v1460, 1.442695
  %v1462 = vpow.pop %v1461
  %v1463 = vadd.f32 %v1462, 1.0
  %v1464 = vrcp.pop %v1463
  %v1465 = vmul.f32 %v1463, %v1464
  %v1466 = vsub.f32 1.0, %v1465
  %v1467 = vmul.f32 %v1464, %v1466
  %v1468 = vadd.f32 %v1464, %v1467
  %vm1469 = vweird.f32 %v1463
  %vm1470 = vweird.f32 %v1464
  %vm1471 = vmor %vm1469, %vm1470
  %v1472 = vsel %vm1471, %v1464, %v1468
  %v1473 = vand.u32 2147483647, %v1463
  %vm1474 = vcmp.eq.f32.partialorder %v1473, 8.507059e+37
  %v1475 = vand.u32 %v1463, 2147483648
  %v1476 = vor.u32 1.1754944e-38, %v1475
  %v1477 = vsel %vm1474, %v1476, %v1472
  %v1478 = vmul.f32 1.0, %v1477
  %v1479 = vsel %vm31, %v1459, %v1478
  %v1480 = vmul.f32 %v1479, %v1424
  %1482 = vrot.lane.b32.xlu0 %v1479, 64
  %v1483 = vpop.permute.xlu0 %1482
  %v1485 = vmul.f32 %v1479, %v1483
  %1487 = vrot.lane.b32.xlu0 %v1485, 32
  %v1488 = vpop.permute.xlu0 %1487
  %v1490 = vadd.f32 %v1480, %v1488
  %v1491 = vtanh.pop %v1490
  %1493 = vrot.lane.b32.xlu0 %v1491, 64
  %v1494 = vpop.permute.xlu0 %1493
  %v1496 = vmul.f32 %v1479, %v1494
  %1498 = vrot.lane.b32.xlu0 %v1496, 32
  %v1499 = vpop.permute.xlu0 %1498
  %1501 = vst.msk [vmem:[%s875] sm:$0xff] %vm33, %v1499
  %v1502 = vsel %vm33, %v1499, 0
  %1504 = vmatpush.msra.mxu0 0.0
  %1505 = vmatpush.msra.mxu0 0.0
  %1506 = vmatpush.msra.mxu0 0.0
  %1507 = vmatpush.msra.mxu0 0.0
  %1508 = vmatpush.msra.mxu0 0.0
  %1509 = vmatpush.msra.mxu0 0.0
  %1510 = vmatpush.msra.mxu0 0.0
  %1511 = vmatpush.msra.mxu0 0.0
  %1512 = vmatpush.msra.mxu0 0.0
  %1513 = vmatpush.msra.mxu0 0.0
  %1514 = vmatpush.msra.mxu0 0.0
  %1515 = vmatpush.msra.mxu0 0.0
  %1516 = vmatpush.msra.mxu0 %v1235
  %1517 = vmatpush.msra.mxu0 %v1234
  %1518 = vmatpush.msra.mxu0 %v1233
  %1519 = vmatpush.msra.mxu0 %v1232
  %1520 = vmatmul.f32.gmra.mxu0 %v1502
  %v1521 = vpop.f32.mrf.mxu0
  %v1522 = vadd.f32 0.0, %v1521
  %1523 = vdwg.mxu0
  %v1524 = vadd.f32 %v1292, %v1522
  %v1525 = vtanh.pop %v1524
  %v1526 = vxor.u32 %v1524, 2147483648
  %v1527 = vmul.f32 %v1526, 1.442695
  %v1528 = vpow.pop %v1527
  %v1529 = vadd.f32 %v1528, 1.0
  %v1530 = vrcp.pop %v1529
  %v1531 = vmul.f32 %v1529, %v1530
  %v1532 = vsub.f32 1.0, %v1531
  %v1533 = vmul.f32 %v1530, %v1532
  %v1534 = vadd.f32 %v1530, %v1533
  %vm1535 = vweird.f32 %v1529
  %vm1536 = vweird.f32 %v1530
  %vm1537 = vmor %vm1535, %vm1536
  %v1538 = vsel %vm1537, %v1530, %v1534
  %v1539 = vand.u32 2147483647, %v1529
  %vm1540 = vcmp.eq.f32.partialorder %v1539, 8.507059e+37
  %v1541 = vand.u32 %v1529, 2147483648
  %v1542 = vor.u32 1.1754944e-38, %v1541
  %v1543 = vsel %vm1540, %v1542, %v1538
  %v1544 = vmul.f32 1.0, %v1543
  %v1545 = vsel %vm31, %v1525, %v1544
  %v1546 = vmul.f32 %v1545, %v1490
  %1548 = vrot.lane.b32.xlu0 %v1545, 64
  %v1549 = vpop.permute.xlu0 %1548
  %v1551 = vmul.f32 %v1545, %v1549
  %1553 = vrot.lane.b32.xlu0 %v1551, 32
  %v1554 = vpop.permute.xlu0 %1553
  %v1556 = vadd.f32 %v1546, %v1554
  %v1557 = vtanh.pop %v1556
  %1559 = vrot.lane.b32.xlu0 %v1557, 64
  %v1560 = vpop.permute.xlu0 %1559
  %v1562 = vmul.f32 %v1545, %v1560
  %1564 = vrot.lane.b32.xlu0 %v1562, 32
  %v1565 = vpop.permute.xlu0 %1564
  %1567 = vst.msk [vmem:[%s942] sm:$0xff] %vm33, %v1565
  %v1568 = vsel %vm33, %v1565, 0
  %1570 = vmatpush.msra.mxu0 0.0
  %1571 = vmatpush.msra.mxu0 0.0
  %1572 = vmatpush.msra.mxu0 0.0
  %1573 = vmatpush.msra.mxu0 0.0
  %1574 = vmatpush.msra.mxu0 0.0
  %1575 = vmatpush.msra.mxu0 0.0
  %1576 = vmatpush.msra.mxu0 0.0
  %1577 = vmatpush.msra.mxu0 0.0
  %1578 = vmatpush.msra.mxu0 0.0
  %1579 = vmatpush.msra.mxu0 0.0
  %1580 = vmatpush.msra.mxu0 0.0
  %1581 = vmatpush.msra.mxu0 0.0
  %1582 = vmatpush.msra.mxu0 %v1235
  %1583 = vmatpush.msra.mxu0 %v1234
  %1584 = vmatpush.msra.mxu0 %v1233
  %1585 = vmatpush.msra.mxu0 %v1232
  %1586 = vmatmul.f32.gmra.mxu0 %v1568
  %v1587 = vpop.f32.mrf.mxu0
  %v1588 = vadd.f32 0.0, %v1587
  %1589 = vdwg.mxu0
  %v1590 = vadd.f32 %v1295, %v1588
  %v1591 = vtanh.pop %v1590
  %v1592 = vxor.u32 %v1590, 2147483648
  %v1593 = vmul.f32 %v1592, 1.442695
  %v1594 = vpow.pop %v1593
  %v1595 = vadd.f32 %v1594, 1.0
  %v1596 = vrcp.pop %v1595
  %v1597 = vmul.f32 %v1595, %v1596
  %v1598 = vsub.f32 1.0, %v1597
  %v1599 = vmul.f32 %v1596, %v1598
  %v1600 = vadd.f32 %v1596, %v1599
  %vm1601 = vweird.f32 %v1595
  %vm1602 = vweird.f32 %v1596
  %vm1603 = vmor %vm1601, %vm1602
  %v1604 = vsel %vm1603, %v1596, %v1600
  %v1605 = vand.u32 2147483647, %v1595
  %vm1606 = vcmp.eq.f32.partialorder %v1605, 8.507059e+37
  %v1607 = vand.u32 %v1595, 2147483648
  %v1608 = vor.u32 1.1754944e-38, %v1607
  %v1609 = vsel %vm1606, %v1608, %v1604
  %v1610 = vmul.f32 1.0, %v1609
  %v1611 = vsel %vm31, %v1591, %v1610
  %v1612 = vmul.f32 %v1611, %v1556
  %1614 = vrot.lane.b32.xlu0 %v1611, 64
  %v1615 = vpop.permute.xlu0 %1614
  %v1617 = vmul.f32 %v1611, %v1615
  %1619 = vrot.lane.b32.xlu0 %v1617, 32
  %v1620 = vpop.permute.xlu0 %1619
  %v1622 = vadd.f32 %v1612, %v1620
  %v1623 = vtanh.pop %v1622
  %1625 = vrot.lane.b32.xlu0 %v1623, 64
  %v1626 = vpop.permute.xlu0 %1625
  %v1628 = vmul.f32 %v1611, %v1626
  %1630 = vrot.lane.b32.xlu0 %v1628, 32
  %v1631 = vpop.permute.xlu0 %1630
  %1633 = vst.msk [vmem:[%s1009] sm:$0xff] %vm33, %v1631
  %v1634 = vsel %vm33, %v1631, 0
  %1636 = vmatpush.msra.mxu0 0.0
  %1637 = vmatpush.msra.mxu0 0.0
  %1638 = vmatpush.msra.mxu0 0.0
  %1639 = vmatpush.msra.mxu0 0.0
  %1640 = vmatpush.msra.mxu0 0.0
  %1641 = vmatpush.msra.mxu0 0.0
  %1642 = vmatpush.msra.mxu0 0.0
  %1643 = vmatpush.msra.mxu0 0.0
  %1644 = vmatpush.msra.mxu0 0.0
  %1645 = vmatpush.msra.mxu0 0.0
  %1646 = vmatpush.msra.mxu0 0.0
  %1647 = vmatpush.msra.mxu0 0.0
  %1648 = vmatpush.msra.mxu0 %v1235
  %1649 = vmatpush.msra.mxu0 %v1234
  %1650 = vmatpush.msra.mxu0 %v1233
  %1651 = vmatpush.msra.mxu0 %v1232
  %1652 = vmatmul.f32.gmra.mxu0 %v1634
  %v1653 = vpop.f32.mrf.mxu0
  %v1654 = vadd.f32 0.0, %v1653
  %1655 = vdwg.mxu0
  %v1656 = vadd.f32 %v1298, %v1654
  %v1657 = vtanh.pop %v1656
  %v1658 = vxor.u32 %v1656, 2147483648
  %v1659 = vmul.f32 %v1658, 1.442695
  %v1660 = vpow.pop %v1659
  %v1661 = vadd.f32 %v1660, 1.0
  %v1662 = vrcp.pop %v1661
  %v1663 = vmul.f32 %v1661, %v1662
  %v1664 = vsub.f32 1.0, %v1663
  %v1665 = vmul.f32 %v1662, %v1664
  %v1666 = vadd.f32 %v1662, %v1665
  %vm1667 = vweird.f32 %v1661
  %vm1668 = vweird.f32 %v1662
  %vm1669 = vmor %vm1667, %vm1668
  %v1670 = vsel %vm1669, %v1662, %v1666
  %v1671 = vand.u32 2147483647, %v1661
  %vm1672 = vcmp.eq.f32.partialorder %v1671, 8.507059e+37
  %v1673 = vand.u32 %v1661, 2147483648
  %v1674 = vor.u32 1.1754944e-38, %v1673
  %v1675 = vsel %vm1672, %v1674, %v1670
  %v1676 = vmul.f32 1.0, %v1675
  %v1677 = vsel %vm31, %v1657, %v1676
  %v1678 = vmul.f32 %v1677, %v1622
  %1680 = vrot.lane.b32.xlu0 %v1677, 64
  %v1681 = vpop.permute.xlu0 %1680
  %v1683 = vmul.f32 %v1677, %v1681
  %1685 = vrot.lane.b32.xlu0 %v1683, 32
  %v1686 = vpop.permute.xlu0 %1685
  %v1688 = vadd.f32 %v1678, %v1686
  %v1689 = vtanh.pop %v1688
  %1691 = vrot.lane.b32.xlu0 %v1689, 64
  %v1692 = vpop.permute.xlu0 %1691
  %v1694 = vmul.f32 %v1677, %v1692
  %1696 = vrot.lane.b32.xlu0 %v1694, 32
  %v1697 = vpop.permute.xlu0 %1696
  %1699 = vst.msk [vmem:[%s1076] sm:$0xff] %vm33, %v1697
  %v1700 = vsel %vm33, %v1697, 0
  %1702 = vmatpush.msra.mxu0 0.0
  %1703 = vmatpush.msra.mxu0 0.0
  %1704 = vmatpush.msra.mxu0 0.0
  %1705 = vmatpush.msra.mxu0 0.0
  %1706 = vmatpush.msra.mxu0 0.0
  %1707 = vmatpush.msra.mxu0 0.0
  %1708 = vmatpush.msra.mxu0 0.0
  %1709 = vmatpush.msra.mxu0 0.0
  %1710 = vmatpush.msra.mxu0 0.0
  %1711 = vmatpush.msra.mxu0 0.0
  %1712 = vmatpush.msra.mxu0 0.0
  %1713 = vmatpush.msra.mxu0 0.0
  %1714 = vmatpush.msra.mxu0 %v1235
  %1715 = vmatpush.msra.mxu0 %v1234
  %1716 = vmatpush.msra.mxu0 %v1233
  %1717 = vmatpush.msra.mxu0 %v1232
  %1718 = vmatmul.f32.gmra.mxu0 %v1700
  %v1719 = vpop.f32.mrf.mxu0
  %v1720 = vadd.f32 0.0, %v1719
  %1721 = vdwg.mxu0
  %v1722 = vadd.f32 %v1301, %v1720
  %v1723 = vtanh.pop %v1722
  %v1724 = vxor.u32 %v1722, 2147483648
  %v1725 = vmul.f32 %v1724, 1.442695
  %v1726 = vpow.pop %v1725
  %v1727 = vadd.f32 %v1726, 1.0
  %v1728 = vrcp.pop %v1727
  %v1729 = vmul.f32 %v1727, %v1728
  %v1730 = vsub.f32 1.0, %v1729
  %v1731 = vmul.f32 %v1728, %v1730
  %v1732 = vadd.f32 %v1728, %v1731
  %vm1733 = vweird.f32 %v1727
  %vm1734 = vweird.f32 %v1728
  %vm1735 = vmor %vm1733, %vm1734
  %v1736 = vsel %vm1735, %v1728, %v1732
  %v1737 = vand.u32 2147483647, %v1727
  %vm1738 = vcmp.eq.f32.partialorder %v1737, 8.507059e+37
  %v1739 = vand.u32 %v1727, 2147483648
  %v1740 = vor.u32 1.1754944e-38, %v1739
  %v1741 = vsel %vm1738, %v1740, %v1736
  %v1742 = vmul.f32 1.0, %v1741
  %v1743 = vsel %vm31, %v1723, %v1742
  %v1744 = vmul.f32 %v1743, %v1688
  %1746 = vrot.lane.b32.xlu0 %v1743, 64
  %v1747 = vpop.permute.xlu0 %1746
  %v1749 = vmul.f32 %v1743, %v1747
  %1751 = vrot.lane.b32.xlu0 %v1749, 32
  %v1752 = vpop.permute.xlu0 %1751
  %v1754 = vadd.f32 %v1744, %v1752
  %v1755 = vtanh.pop %v1754
  %1757 = vrot.lane.b32.xlu0 %v1755, 64
  %v1758 = vpop.permute.xlu0 %1757
  %v1760 = vmul.f32 %v1743, %v1758
  %1762 = vrot.lane.b32.xlu0 %v1760, 32
  %v1763 = vpop.permute.xlu0 %1762
  %1765 = vst.msk [vmem:[%s1143] sm:$0xff] %vm33, %v1763
  %v1766 = vsel %vm33, %v1763, 0
  %1768 = vmatpush.msra.mxu0 0.0
  %1769 = vmatpush.msra.mxu0 0.0
  %1770 = vmatpush.msra.mxu0 0.0
  %1771 = vmatpush.msra.mxu0 0.0
  %1772 = vmatpush.msra.mxu0 0.0
  %1773 = vmatpush.msra.mxu0 0.0
  %1774 = vmatpush.msra.mxu0 0.0
  %1775 = vmatpush.msra.mxu0 0.0
  %1776 = vmatpush.msra.mxu0 0.0
  %1777 = vmatpush.msra.mxu0 0.0
  %1778 = vmatpush.msra.mxu0 0.0
  %1779 = vmatpush.msra.mxu0 0.0
  %1780 = vmatpush.msra.mxu0 %v1235
  %1781 = vmatpush.msra.mxu0 %v1234
  %1782 = vmatpush.msra.mxu0 %v1233
  %1783 = vmatpush.msra.mxu0 %v1232
  %1784 = vmatmul.f32.gmra.mxu0 %v1766
  %v1785 = vpop.f32.mrf.mxu0
  %v1786 = vadd.f32 0.0, %v1785
  %1787 = vdwg.mxu0
  %v1788 = vadd.f32 %v1304, %v1786
  %v1789 = vtanh.pop %v1788
  %v1790 = vxor.u32 %v1788, 2147483648
  %v1791 = vmul.f32 %v1790, 1.442695
  %v1792 = vpow.pop %v1791
  %v1793 = vadd.f32 %v1792, 1.0
  %v1794 = vrcp.pop %v1793
  %v1795 = vmul.f32 %v1793, %v1794
  %v1796 = vsub.f32 1.0, %v1795
  %v1797 = vmul.f32 %v1794, %v1796
  %v1798 = vadd.f32 %v1794, %v1797
  %vm1799 = vweird.f32 %v1793
  %vm1800 = vweird.f32 %v1794
  %vm1801 = vmor %vm1799, %vm1800
  %v1802 = vsel %vm1801, %v1794, %v1798
  %v1803 = vand.u32 2147483647, %v1793
  %vm1804 = vcmp.eq.f32.partialorder %v1803, 8.507059e+37
  %v1805 = vand.u32 %v1793, 2147483648
  %v1806 = vor.u32 1.1754944e-38, %v1805
  %v1807 = vsel %vm1804, %v1806, %v1802
  %v1808 = vmul.f32 1.0, %v1807
  %v1809 = vsel %vm31, %v1789, %v1808
  %v1810 = vmul.f32 %v1809, %v1754
  %1812 = vrot.lane.b32.xlu0 %v1809, 64
  %v1813 = vpop.permute.xlu0 %1812
  %v1815 = vmul.f32 %v1809, %v1813
  %1817 = vrot.lane.b32.xlu0 %v1815, 32
  %v1818 = vpop.permute.xlu0 %1817
  %v1820 = vadd.f32 %v1810, %v1818
  %v1821 = vtanh.pop %v1820
  %1823 = vrot.lane.b32.xlu0 %v1821, 64
  %v1824 = vpop.permute.xlu0 %1823
  %v1826 = vmul.f32 %v1809, %v1824
  %1828 = vrot.lane.b32.xlu0 %v1826, 32
  %v1829 = vpop.permute.xlu0 %1828
  %1831 = vst.msk [vmem:[%s1210] sm:$0xff] %vm33, %v1829
  %s1832 = scalar_lea.vmem %s6, 8
  %1833 = vst.msk [vmem:[%s1832] sm:$0xff] %vm33, %v1829
  %1835 = vrot.lane.b32.xlu0 %v1820, 96
  %v1836 = vpop.permute.xlu0 %1835
  %s1838 = scalar_lea.vmem %s7, 8
  %1839 = vst.msk [vmem:[%s1838] sm:$0xff] %vm33, %v1836
  // Predicated region
  $region22: #{forward_pallas.1} parent=0 // pred_check
    _
  $region23: #{forward_pallas.1} parent=0 // pred_check_branch
    %1841 = sbr.rel (0) target = $region25
  $region24: #{forward_pallas.1} parent=0 // pred_region
    _
  $region25: #{forward_pallas.1} parent=0 // pred_fallthru
    _
  // Predicated region
  $region26: #{forward_pallas.1} parent=0 // pred_check
    _
  $region27: #{forward_pallas.1} parent=0 // pred_check_branch
    %1843 = sbr.rel (0) target = $region29
  $region28: #{forward_pallas.1} parent=0 // pred_region
    _
  $region29: #{forward_pallas.1} parent=0 // pred_fallthru
    _
  // Predicated region
  $region30: #{forward_pallas.1} parent=0 // pred_check
    _
  $region31: #{forward_pallas.1} parent=0 // pred_check_branch
    %1845 = sbr.rel (0) target = $region33
  $region32: #{forward_pallas.1} parent=0 // pred_region
    _
  $region33: #{forward_pallas.1} parent=0 // pred_fallthru
    _
  // Predicated region
  $region34: #{forward_pallas.1} parent=0 // pred_check
    _
  $region35: #{forward_pallas.1} parent=0 // pred_check_branch
    %1847 = sbr.rel (0) target = $region37
  $region36: #{forward_pallas.1} parent=0 // pred_region
    _
  $region37: #{forward_pallas.1} parent=0 // pred_fallthru
    _
  // Predicated region
  $region38: #{forward_pallas.1} parent=0 // pred_check
    _
  $region39: #{forward_pallas.1} parent=0 // pred_check_branch
    %1849 = sbr.rel (0) target = $region41
  $region40: #{forward_pallas.1} parent=0 // pred_region
    _
  $region41: #{forward_pallas.1} parent=0 // pred_fallthru
    _
  // Predicated region
  $region42: #{forward_pallas.1} parent=0 // pred_check
    _
  $region43: #{forward_pallas.1} parent=0 // pred_check_branch
    %1851 = sbr.rel (0) target = $region45
  $region44: #{forward_pallas.1} parent=0 // pred_region
    _
  $region45: #{forward_pallas.1} parent=0 // pred_fallthru
    _

</llo_original>
